<compile_context>
chip_gen: v7x
topology: tpu7x:2x2x1
jax: 0.10.0
libtpu: 0.0.40
codegen_flags: <defaults>
</compile_context>

<pallas_src>
import math

import jax
import jax.numpy as jnp
from jax.experimental import pallas as pl
from jax.experimental.pallas import tpu as pltpu

LANE = 128  # TPU lane width


def _round_up(x: int, m: int) -> int:
    return (x + m - 1) // m * m


def _layer_dims(input_dim, sizes, output_dim):
    """Mirror SequentialLinearNet.__init__; returns (dims, relu_after_last)."""
    if sizes is None:
        return [input_dim, output_dim], True
    if len(sizes) <= 1:
        # Module quirk: a single hidden size yields Linear+ReLU only
        # (output_dim is ignored by the PyTorch constructor).
        return [input_dim, sizes[0]], True
    return [input_dim] + list(sizes) + [output_dim], False


def _make_mlp_kernel(num_layers: int, relu_last: bool):
    """Fused MLP kernel. refs = (x, w0, b0, w1, b1, ..., out)."""

    def kernel(*refs):
        x_ref, o_ref = refs[0], refs[-1]
        h = x_ref[...]
        for l in range(num_layers):
            w_ref = refs[1 + 2 * l]
            b_ref = refs[2 + 2 * l]
            # MXU matmul: bf16 operands, f32 accumulate.
            h = jnp.dot(h.astype(w_ref.dtype), w_ref[...],
                        preferred_element_type=jnp.float32)
            h = h + b_ref[...]                       # f32 bias add (VPU)
            if l < num_layers - 1 or relu_last:
                h = jnp.maximum(h, 0.0)              # f32 ReLU (VPU)
        o_ref[...] = h.astype(o_ref.dtype)

    return kernel


def sequential_linear_net(x, params, *, relu_last: bool = False, tb: int = 512,
                          compute_dtype=jnp.bfloat16, out_dtype=jnp.bfloat16,
                          min_pallas_batch: int = 256, force_pallas: bool = False):
    """Forward pass of SequentialLinearNet.

    x: (B, input_dim) f32.  params: list of (W_t, b_row), W_t pre-transposed
    to (in_features, out_features), b_row (1, out_features), both f32.
    Returns (B, final_out_features) in x.dtype.
    """
    B, in_dim = x.shape
    num_layers = len(params)
    out_dim = params[-1][0].shape[1]

    # ---- small-batch fallback: XLA's fused dot chain beats a grid=(1,) call ----
    if (not force_pallas) and B < min_pallas_batch:
        h = x
        for l, (w, b) in enumerate(params):
            h = h @ w + b
            if l < num_layers - 1 or relu_last:
                h = jnp.maximum(h, 0.0)
        return h.astype(x.dtype)

    # ---- Pallas path ----
    out_cols = _round_up(out_dim, LANE)          # lane-dense output (unmasked vst)
    tb_eff = _round_up(max(8, min(tb, _round_up(B, 8))), 8)
    grid = (pl.cdiv(B, tb_eff),)                 # partial tail block is masked

    # Weights/biases: cast once (tiny arrays), pad only the FINAL layer's
    # output columns to a 128-lane multiple (exact zeros -> exact result).
    # x itself stays unpadded f32 in HBM; bf16 cast happens inside the kernel.
    ops = []
    in_specs = [pl.BlockSpec((tb_eff, in_dim), lambda i: (i, 0))]
    for l, (w, b) in enumerate(params):
        wc = w.astype(compute_dtype)
        bc = b.astype(jnp.float32)
        if l == num_layers - 1 and out_cols != out_dim:
            wc = jnp.pad(wc, ((0, 0), (0, out_cols - out_dim)))
            bc = jnp.pad(bc, ((0, 0), (0, out_cols - out_dim)))
        ops += [wc, bc]
        # Constant block index -> VMEM-resident across grid steps.
        in_specs += [pl.BlockSpec(wc.shape, lambda i: (0, 0)),
                     pl.BlockSpec(bc.shape, lambda i: (0, 0))]

    out_spec = pl.BlockSpec((tb_eff, out_cols), lambda i: (i, 0))

    comp_itemsize = jnp.dtype(compute_dtype).itemsize
    out_itemsize = jnp.dtype(out_dtype).itemsize

    # VMEM budget: double-buffered x/out tiles + resident (double-buffered)
    # weights/biases + intermediate activations, with 4x margin, well under
    # v7x's 64 MiB physical VMEM.
    resident_bytes = 2 * sum(int(op.size) * op.dtype.itemsize for op in ops)
    stream_bytes = 2 * tb_eff * (in_dim * x.dtype.itemsize + out_cols * out_itemsize)
    max_feat = max([in_dim] + [w.shape[1] for (w, _) in params] + [out_cols])
    act_bytes = 2 * tb_eff * max_feat * 4
    vmem_limit = int(min(max(4 * (resident_bytes + stream_bytes + act_bytes),
                             16 << 20), 32 << 20))

    # Cost estimate based on the REAL (unpadded) problem.
    flops = 2 * B * sum(w.shape[0] * w.shape[1] for (w, _) in params)
    bytes_accessed = (
        x.size * x.dtype.itemsize
        + sum(w.size * comp_itemsize + b.size * 4 for (w, b) in params)
        + B * out_dim * out_itemsize
    )

    out_padded = pl.pallas_call(
        _make_mlp_kernel(num_layers, relu_last),
        out_shape=jax.ShapeDtypeStruct((B, out_cols), out_dtype),
        grid_spec=pltpu.PrefetchScalarGridSpec(
            num_scalar_prefetch=0,
            grid=grid,
            in_specs=in_specs,
            out_specs=out_spec,
        ),
        compiler_params=pltpu.CompilerParams(
            dimension_semantics=("parallel",),
            vmem_limit_bytes=vmem_limit,
        ),
        cost_estimate=pl.CostEstimate(
            flops=int(flops),
            transcendentals=0,
            bytes_accessed=int(bytes_accessed),
        ),
    )(x, *ops)

    # Strip lane padding and restore the caller's dtype.
    return out_padded[:, :out_dim].astype(x.dtype)


def init_params(key, input_dim, sizes, output_dim):
    """torch.nn.Linear-style init (U[-1/sqrt(fan_in), +]); weights stored
    pre-transposed as (in_features, out_features)."""
    dims, relu_last = _layer_dims(input_dim, sizes, output_dim)
    params = []
    for i in range(len(dims) - 1):
        fan_in, fan_out = dims[i], dims[i + 1]
        key, kw, kb = jax.random.split(key, 3)
        bound = 1.0 / math.sqrt(fan_in)
        w_t = jax.random.uniform(kw, (fan_in, fan_out), jnp.float32, -bound, bound)
        b = jax.random.uniform(kb, (1, fan_out), jnp.float32, -bound, bound)
        params.append((w_t, b))
    return params, relu_last


def reference_forward_f32(x, params, relu_last=False):
    """Plain-JAX f32 reference of the module's forward pass."""
    h = x
    n = len(params)
    for l, (w, b) in enumerate(params):
        h = h @ w + b
        if l < n - 1 or relu_last:
            h = jnp.maximum(h, 0.0)
    return h


def reference_forward_bf16(x, params, relu_last=False):
    """Reference mirroring the kernel's bf16-operand / f32-accumulate math,
    including the final bf16 writeback rounding."""
    bf = jnp.bfloat16
    h = x
    n = len(params)
    for l, (w, b) in enumerate(params):
        h = jnp.dot(h.astype(bf), w.astype(bf),
                    preferred_element_type=jnp.float32) + b
        if l < n - 1 or relu_last:
            h = jnp.maximum(h, 0.0)
    return h.astype(bf).astype(jnp.float32)


if __name__ == "__main__":
    # Module config: SequentialLinearNet(input_dim=32, output_dim=16, sizes=[64, 32])
    input_dim, output_dim, sizes = 32, 16, [64, 32]

    key = jax.random.PRNGKey(0)
    key, kp = jax.random.split(key)
    params, relu_last = init_params(kp, input_dim, sizes, output_dim)

    # --- Pallas path: B=1000 gives a 2-step grid at tb=512 (both v7x TCs)
    #     and a non-multiple tail block (exercises masked writeback). ---
    B = 1000
    key, kx = jax.random.split(key)
    x = jax.random.normal(kx, (B, input_dim), jnp.float32)

    out = sequential_linear_net(x, params, relu_last=relu_last,
                                tb=512, force_pallas=True)
    out = jax.block_until_ready(out)
    assert out.shape == (B, output_dim)

    # Tight check vs a reference using the same bf16-operand math + bf16 writeback.
    ref_bf16 = reference_forward_bf16(x, params, relu_last)
    assert jnp.allclose(out, ref_bf16, atol=5e-3, rtol=5e-3), "bf16-matched check failed"

    # Looser check vs the strict f32 module semantics (bf16 MXU operands).
    ref_f32 = reference_forward_f32(x, params, relu_last)
    assert jnp.allclose(out, ref_f32, atol=5e-2, rtol=5e-2), "f32 reference check failed"

    # --- Small-batch auto-dispatch (falls back to the plain XLA dot chain). ---
    x_small = jax.random.normal(jax.random.PRNGKey(1), (8, input_dim), jnp.float32)
    out_small = jax.block_until_ready(
        sequential_linear_net(x_small, params, relu_last=relu_last))
    assert out_small.shape == (8, output_dim)
    assert jnp.allclose(out_small, reference_forward_f32(x_small, params, relu_last),
                        atol=1e-5, rtol=1e-5), "small-batch fallback check failed"

    print("KERNEL_OK")
</pallas_src>

<mosaic_0001>
module attributes {stable_mosaic.version = 11 : i64} {
  func.func @kernel(%arg0: i32, %arg1: memref<512x32xf32, #tpu.memory_space<vmem>>, %arg2: memref<32x64xbf16, #tpu.memory_space<vmem>>, %arg3: memref<1x64xf32, #tpu.memory_space<vmem>>, %arg4: memref<64x32xbf16, #tpu.memory_space<vmem>>, %arg5: memref<1x32xf32, #tpu.memory_space<vmem>>, %arg6: memref<32x128xbf16, #tpu.memory_space<vmem>>, %arg7: memref<1x128xf32, #tpu.memory_space<vmem>>, %arg8: memref<512x128xbf16, #tpu.memory_space<vmem>>) attributes {dimension_semantics = [#tpu.dimension_semantics<parallel>], iteration_bounds = array<i64: 2>, scalar_prefetch = 0 : i64, scratch_operands = 0 : i64, tpu.core_type = #tpu.core_type<tc>, window_params = [{transform_indices = @transform_0, window_bounds = array<i64: 512, 32>}, {pipeline_mode = #tpu.pipeline_mode<synchronous>, transform_indices = @transform_1, window_bounds = array<i64: 32, 64>}, {pipeline_mode = #tpu.pipeline_mode<synchronous>, transform_indices = @transform_2, window_bounds = array<i64: 1, 64>}, {pipeline_mode = #tpu.pipeline_mode<synchronous>, transform_indices = @transform_3, window_bounds = array<i64: 64, 32>}, {pipeline_mode = #tpu.pipeline_mode<synchronous>, transform_indices = @transform_4, window_bounds = array<i64: 1, 32>}, {pipeline_mode = #tpu.pipeline_mode<synchronous>, transform_indices = @transform_5, window_bounds = array<i64: 32, 128>}, {pipeline_mode = #tpu.pipeline_mode<synchronous>, transform_indices = @transform_6, window_bounds = array<i64: 1, 128>}, {transform_indices = @transform_7, window_bounds = array<i64: 512, 128>}]} {
    %c0 = arith.constant 0 : index
    %c0_0 = arith.constant 0 : index
    %0 = vector.load %arg1[%c0, %c0_0] : memref<512x32xf32, #tpu.memory_space<vmem>>, vector<512x32xf32>
    %1 = arith.truncf %0 : vector<512x32xf32> to vector<512x32xbf16>
    %c0_1 = arith.constant 0 : index
    %c0_2 = arith.constant 0 : index
    %2 = vector.load %arg2[%c0_1, %c0_2] : memref<32x64xbf16, #tpu.memory_space<vmem>>, vector<32x64xbf16>
    %cst = arith.constant dense<0.000000e+00> : vector<512x64xf32>
    %3 = tpu.matmul %1, %2, %cst {dimension_numbers = #tpu.dot_dimension_numbers<[1], [0], [0], [1], [0, 0, 1, 1], [], []>} : vector<512x32xbf16>, vector<32x64xbf16>, vector<512x64xf32> -> vector<512x64xf32>
    %c0_3 = arith.constant 0 : index
    %c0_4 = arith.constant 0 : index
    %4 = vector.load %arg3[%c0_3, %c0_4] : memref<1x64xf32, #tpu.memory_space<vmem>>, vector<1x64xf32>
    %5 = vector.broadcast %4 : vector<1x64xf32> to vector<512x64xf32>
    %6 = arith.addf %3, %5 : vector<512x64xf32>
    %cst_5 = arith.constant 0.000000e+00 : f32
    %7 = vector.broadcast %cst_5 : f32 to vector<512x64xf32>
    %8 = arith.maximumf %6, %7 : vector<512x64xf32>
    %9 = arith.truncf %8 : vector<512x64xf32> to vector<512x64xbf16>
    %c0_6 = arith.constant 0 : index
    %c0_7 = arith.constant 0 : index
    %10 = vector.load %arg4[%c0_6, %c0_7] : memref<64x32xbf16, #tpu.memory_space<vmem>>, vector<64x32xbf16>
    %cst_8 = arith.constant dense<0.000000e+00> : vector<512x32xf32>
    %11 = tpu.matmul %9, %10, %cst_8 {dimension_numbers = #tpu.dot_dimension_numbers<[1], [0], [0], [1], [0, 0, 1, 1], [], []>} : vector<512x64xbf16>, vector<64x32xbf16>, vector<512x32xf32> -> vector<512x32xf32>
    %c0_9 = arith.constant 0 : index
    %c0_10 = arith.constant 0 : index
    %12 = vector.load %arg5[%c0_9, %c0_10] : memref<1x32xf32, #tpu.memory_space<vmem>>, vector<1x32xf32>
    %13 = vector.broadcast %12 : vector<1x32xf32> to vector<512x32xf32>
    %14 = arith.addf %11, %13 : vector<512x32xf32>
    %cst_11 = arith.constant 0.000000e+00 : f32
    %15 = vector.broadcast %cst_11 : f32 to vector<512x32xf32>
    %16 = arith.maximumf %14, %15 : vector<512x32xf32>
    %17 = arith.truncf %16 : vector<512x32xf32> to vector<512x32xbf16>
    %c0_12 = arith.constant 0 : index
    %c0_13 = arith.constant 0 : index
    %18 = vector.load %arg6[%c0_12, %c0_13] : memref<32x128xbf16, #tpu.memory_space<vmem>>, vector<32x128xbf16>
    %cst_14 = arith.constant dense<0.000000e+00> : vector<512x128xf32>
    %19 = tpu.matmul %17, %18, %cst_14 {dimension_numbers = #tpu.dot_dimension_numbers<[1], [0], [0], [1], [0, 0, 1, 1], [], []>} : vector<512x32xbf16>, vector<32x128xbf16>, vector<512x128xf32> -> vector<512x128xf32>
    %c0_15 = arith.constant 0 : index
    %c0_16 = arith.constant 0 : index
    %20 = vector.load %arg7[%c0_15, %c0_16] : memref<1x128xf32, #tpu.memory_space<vmem>>, vector<1x128xf32>
    %21 = vector.broadcast %20 : vector<1x128xf32> to vector<512x128xf32>
    %22 = arith.addf %19, %21 : vector<512x128xf32>
    %23 = arith.truncf %22 : vector<512x128xf32> to vector<512x128xbf16>
    %c0_17 = arith.constant 0 : index
    %c0_18 = arith.constant 0 : index
    %24 = vector.load %arg8[%c0_17, %c0_18] : memref<512x128xbf16, #tpu.memory_space<vmem>>, vector<512x128xbf16>
    tpu.vector_store %arg8[%c0_17, %c0_18], %23 {strides = array<i32>} : memref<512x128xbf16, #tpu.memory_space<vmem>>, vector<512x128xbf16>,
    return
  }
  func.func @transform_0(%arg0: i32) -> (i32, i32) {
    %c0_i32 = arith.constant 0 : i32
    %c0_i32_0 = arith.constant 0 : i32
    return %arg0, %c0_i32 : i32, i32
  }
  func.func @transform_1(%arg0: i32) -> (i32, i32) {
    %c0_i32 = arith.constant 0 : i32
    %c0_i32_0 = arith.constant 0 : i32
    %c0_i32_1 = arith.constant 0 : i32
    return %c0_i32, %c0_i32_0 : i32, i32
  }
  func.func @transform_2(%arg0: i32) -> (i32, i32) {
    %c0_i32 = arith.constant 0 : i32
    %c0_i32_0 = arith.constant 0 : i32
    %c0_i32_1 = arith.constant 0 : i32
    return %c0_i32, %c0_i32_0 : i32, i32
  }
  func.func @transform_3(%arg0: i32) -> (i32, i32) {
    %c0_i32 = arith.constant 0 : i32
    %c0_i32_0 = arith.constant 0 : i32
    %c0_i32_1 = arith.constant 0 : i32
    return %c0_i32, %c0_i32_0 : i32, i32
  }
  func.func @transform_4(%arg0: i32) -> (i32, i32) {
    %c0_i32 = arith.constant 0 : i32
    %c0_i32_0 = arith.constant 0 : i32
    %c0_i32_1 = arith.constant 0 : i32
    return %c0_i32, %c0_i32_0 : i32, i32
  }
  func.func @transform_5(%arg0: i32) -> (i32, i32) {
    %c0_i32 = arith.constant 0 : i32
    %c0_i32_0 = arith.constant 0 : i32
    %c0_i32_1 = arith.constant 0 : i32
    return %c0_i32, %c0_i32_0 : i32, i32
  }
  func.func @transform_6(%arg0: i32) -> (i32, i32) {
    %c0_i32 = arith.constant 0 : i32
    %c0_i32_0 = arith.constant 0 : i32
    %c0_i32_1 = arith.constant 0 : i32
    return %c0_i32, %c0_i32_0 : i32, i32
  }
  func.func @transform_7(%arg0: i32) -> (i32, i32) {
    %c0_i32 = arith.constant 0 : i32
    %c0_i32_0 = arith.constant 0 : i32
    return %arg0, %c0_i32 : i32, i32
  }
}

</mosaic_0001>

<llo_original>
// kernel: tpu_custom_call.1
$region0: #{tpu_custom_call.1}
  #allocation0 [shape = 'u32[]', space=smem, size = 0x4, offset = 0x4, fixed_abs, tag = 'smem constant byte address 0x4 - core index']
  #allocation1 [shape = 'u32[144,128]{1,0:T(1,128)}', space=vmem, size = 0x12000, scoped, tag = 'internal scratch']
  %s0 = inlined_call_operand.vmem [shape: f32[1000,32], index: 0, kind: input, shape index: {}]
  %s1 = inlined_call_operand.vmem [shape: bf16[32,64], index: 1, kind: input, shape index: {}]
  %s2 = inlined_call_operand.vmem [shape: f32[1,64], index: 2, kind: input, shape index: {}]
  %s3 = inlined_call_operand.vmem [shape: bf16[64,32], index: 3, kind: input, shape index: {}]
  %s4 = inlined_call_operand.vmem [shape: f32[1,32], index: 4, kind: input, shape index: {}]
  %s5 = inlined_call_operand.vmem [shape: bf16[32,128], index: 5, kind: input, shape index: {}]
  %s6 = inlined_call_operand.vmem [shape: f32[1,128], index: 6, kind: input, shape index: {}]
  %s7 = inlined_call_operand.hbm [shape: bf16[1000,128], index: 7, kind: output, shape index: {}]
  %s8 = sld [smem:[#allocation0]]
  $region61: #{tpu_custom_call.1} parent=0
    _
  %s10 = ssub.s32 1, %s8
  %s11 = scalar_select 0, %s10, %s8
  $region1: #{tpu_custom_call.1} parent=0
    #allocation2 [shape = 'u8[262144]{0}', space=vmem, size = 0x40000, scoped, tag = 'output window, operand 0']
    #allocation3 [shape = 's32[2]{0}', space=sflag, size = 0x8, scoped, tag = 'scoped memory for tpu_custom_call.1']
    %12 = vsyncpa [#allocation3], 0
    %s13 = scalar_lea.sflag [#allocation3], 1
    %14 = vsyncpa %s13, 0
    loop: start=0, step=1, limit=4
    $region2: #{tpu_custom_call.1} parent=1 // loop_pre_header
      _
    $region3: #{tpu_custom_call.1} parent=1 // loop_header
      %s16 = sphi 0, %s20
      %p17 = scmp.ge.s32.totalorder %s16, 4
      %s26 = sphi 0, %s28
      %s29 = sphi 0, %s26
      %s30 = sphi 0, %s29
      %s46 = sphi 0, %s30
      %s50 = sphi 0, %s50
      %s52 = sphi 0, %s50
      %s53 = sphi 0, %s52
      %s67 = sphi 0, %s53
      %s71 = sphi 0, %s71
      %s73 = sphi 0, %s71
      %s74 = sphi 0, %s73
      %s88 = sphi 0, %s74
      %s92 = sphi 0, %s92
      %s94 = sphi 0, %s92
      %s95 = sphi 0, %s94
      %s109 = sphi 0, %s95
      %s113 = sphi 0, %s113
      %s115 = sphi 0, %s113
      %s116 = sphi 0, %s115
      %s130 = sphi 0, %s116
      %s134 = sphi 0, %s134
      %s136 = sphi 0, %s134
      %s137 = sphi 0, %s136
      %s151 = sphi 0, %s137
      %s155 = sphi 0, %s155
      %s157 = sphi 0, %s155
      %s158 = sphi 0, %s157
      %s172 = sphi 0, %s158
      %s178 = sphi 0, %s180
      %s181 = sphi 0, %s178
      %s182 = sphi 0, %s181
      %s198 = sphi 0, %s182
    $region4: #{tpu_custom_call.1} parent=1 // loop_header_branch
      %19 = sbr.rel (%p17) target = $region8
    $region5: #{tpu_custom_call.1} parent=1 // loop_body
      %s21 = ssub.s32 %s16, 1
      %s22 = ssub.s32 %s16, 2
      %s23 = sadd.s32 %s16, 1
      %s24 = ssub.s32 %s16, %s23
      %p25 = scmp.eq.s32.totalorder %s24, 0
      %s27 = sadd.s32 %s26, 1
      %s28 = scalar_select %p25, %s26, %s27
      %p31 = pneg %p25
      %p32 = scmp.eq.s32.totalorder %s16, 1
      %p33 = por %p31, %p32
      %p34 = scmp.ne.s32.totalorder %s26, %s29
      %p35 = scmp.eq.s32.totalorder %s16, 0
      %p36 = por %p34, %p35
      %p37 = scmp.ne.s32.totalorder %s26, %s29
      %p38 = scmp.eq.s32.totalorder %s21, 1
      %p39 = por %p37, %p38
      %p40 = scmp.ne.s32.totalorder %s29, %s30
      %p41 = scmp.eq.s32.totalorder %s21, 0
      %p42 = por %p40, %p41
      %p43 = scmp.ne.s32.totalorder %s29, %s30
      %p44 = scmp.eq.s32.totalorder %s22, 1
      %p45 = por %p43, %p44
      %p47 = scmp.ne.s32.totalorder %s30, %s46
      %p48 = scmp.eq.s32.totalorder %s22, 0
      %p49 = por %p47, %p48
      %s51 = sadd.s32 %s50, 1
      %p54 = scmp.eq.s32.totalorder %s16, 1
      %p55 = scmp.ne.s32.totalorder %s50, %s52
      %p56 = scmp.eq.s32.totalorder %s16, 0
      %p57 = por %p55, %p56
      %p58 = scmp.ne.s32.totalorder %s50, %s52
      %p59 = scmp.eq.s32.totalorder %s21, 1
      %p60 = por %p58, %p59
      %p61 = scmp.ne.s32.totalorder %s52, %s53
      %p62 = scmp.eq.s32.totalorder %s21, 0
      %p63 = por %p61, %p62
      %p64 = scmp.ne.s32.totalorder %s52, %s53
      %p65 = scmp.eq.s32.totalorder %s22, 1
      %p66 = por %p64, %p65
      %p68 = scmp.ne.s32.totalorder %s53, %s67
      %p69 = scmp.eq.s32.totalorder %s22, 0
      %p70 = por %p68, %p69
      %s72 = sadd.s32 %s71, 1
      %p75 = scmp.eq.s32.totalorder %s16, 1
      %p76 = scmp.ne.s32.totalorder %s71, %s73
      %p77 = scmp.eq.s32.totalorder %s16, 0
      %p78 = por %p76, %p77
      %p79 = scmp.ne.s32.totalorder %s71, %s73
      %p80 = scmp.eq.s32.totalorder %s21, 1
      %p81 = por %p79, %p80
      %p82 = scmp.ne.s32.totalorder %s73, %s74
      %p83 = scmp.eq.s32.totalorder %s21, 0
      %p84 = por %p82, %p83
      %p85 = scmp.ne.s32.totalorder %s73, %s74
      %p86 = scmp.eq.s32.totalorder %s22, 1
      %p87 = por %p85, %p86
      %p89 = scmp.ne.s32.totalorder %s74, %s88
      %p90 = scmp.eq.s32.totalorder %s22, 0
      %p91 = por %p89, %p90
      %s93 = sadd.s32 %s92, 1
      %p96 = scmp.eq.s32.totalorder %s16, 1
      %p97 = scmp.ne.s32.totalorder %s92, %s94
      %p98 = scmp.eq.s32.totalorder %s16, 0
      %p99 = por %p97, %p98
      %p100 = scmp.ne.s32.totalorder %s92, %s94
      %p101 = scmp.eq.s32.totalorder %s21, 1
      %p102 = por %p100, %p101
      %p103 = scmp.ne.s32.totalorder %s94, %s95
      %p104 = scmp.eq.s32.totalorder %s21, 0
      %p105 = por %p103, %p104
      %p106 = scmp.ne.s32.totalorder %s94, %s95
      %p107 = scmp.eq.s32.totalorder %s22, 1
      %p108 = por %p106, %p107
      %p110 = scmp.ne.s32.totalorder %s95, %s109
      %p111 = scmp.eq.s32.totalorder %s22, 0
      %p112 = por %p110, %p111
      %s114 = sadd.s32 %s113, 1
      %p117 = scmp.eq.s32.totalorder %s16, 1
      %p118 = scmp.ne.s32.totalorder %s113, %s115
      %p119 = scmp.eq.s32.totalorder %s16, 0
      %p120 = por %p118, %p119
      %p121 = scmp.ne.s32.totalorder %s113, %s115
      %p122 = scmp.eq.s32.totalorder %s21, 1
      %p123 = por %p121, %p122
      %p124 = scmp.ne.s32.totalorder %s115, %s116
      %p125 = scmp.eq.s32.totalorder %s21, 0
      %p126 = por %p124, %p125
      %p127 = scmp.ne.s32.totalorder %s115, %s116
      %p128 = scmp.eq.s32.totalorder %s22, 1
      %p129 = por %p127, %p128
      %p131 = scmp.ne.s32.totalorder %s116, %s130
      %p132 = scmp.eq.s32.totalorder %s22, 0
      %p133 = por %p131, %p132
      %s135 = sadd.s32 %s134, 1
      %p138 = scmp.eq.s32.totalorder %s16, 1
      %p139 = scmp.ne.s32.totalorder %s134, %s136
      %p140 = scmp.eq.s32.totalorder %s16, 0
      %p141 = por %p139, %p140
      %p142 = scmp.ne.s32.totalorder %s134, %s136
      %p143 = scmp.eq.s32.totalorder %s21, 1
      %p144 = por %p142, %p143
      %p145 = scmp.ne.s32.totalorder %s136, %s137
      %p146 = scmp.eq.s32.totalorder %s21, 0
      %p147 = por %p145, %p146
      %p148 = scmp.ne.s32.totalorder %s136, %s137
      %p149 = scmp.eq.s32.totalorder %s22, 1
      %p150 = por %p148, %p149
      %p152 = scmp.ne.s32.totalorder %s137, %s151
      %p153 = scmp.eq.s32.totalorder %s22, 0
      %p154 = por %p152, %p153
      %s156 = sadd.s32 %s155, 1
      %p159 = scmp.eq.s32.totalorder %s16, 1
      %p160 = scmp.ne.s32.totalorder %s155, %s157
      %p161 = scmp.eq.s32.totalorder %s16, 0
      %p162 = por %p160, %p161
      %p163 = scmp.ne.s32.totalorder %s155, %s157
      %p164 = scmp.eq.s32.totalorder %s21, 1
      %p165 = por %p163, %p164
      %p166 = scmp.ne.s32.totalorder %s157, %s158
      %p167 = scmp.eq.s32.totalorder %s21, 0
      %p168 = por %p166, %p167
      %p169 = scmp.ne.s32.totalorder %s157, %s158
      %p170 = scmp.eq.s32.totalorder %s22, 1
      %p171 = por %p169, %p170
      %p173 = scmp.ne.s32.totalorder %s158, %s172
      %p174 = scmp.eq.s32.totalorder %s22, 0
      %p175 = por %p173, %p174
      %s176 = ssub.s32 %s16, %s23
      %p177 = scmp.eq.s32.totalorder %s176, 0
      %s179 = sadd.s32 %s178, 1
      %s180 = scalar_select %p177, %s178, %s179
      %p183 = pneg %p177
      %p184 = scmp.eq.s32.totalorder %s16, 1
      %p185 = por %p183, %p184
      %p186 = scmp.ne.s32.totalorder %s178, %s181
      %p187 = scmp.eq.s32.totalorder %s16, 0
      %p188 = por %p186, %p187
      %p189 = scmp.ne.s32.totalorder %s178, %s181
      %p190 = scmp.eq.s32.totalorder %s21, 1
      %p191 = por %p189, %p190
      %p192 = scmp.ne.s32.totalorder %s181, %s182
      %p193 = scmp.eq.s32.totalorder %s21, 0
      %p194 = por %p192, %p193
      %p195 = scmp.ne.s32.totalorder %s181, %s182
      %p196 = scmp.eq.s32.totalorder %s22, 1
      %p197 = por %p195, %p196
      %p199 = scmp.ne.s32.totalorder %s182, %s198
      %p200 = scmp.eq.s32.totalorder %s22, 0
      %p201 = por %p199, %p200
      %p202 = scmp.le.s32.totalorder 1, %s16
      %p203 = scmp.lt.s32.totalorder %s16, 3
      %p204 = pnand %p202, %p203
      %p205 = pneg %p204
      // Predicated region
      $region9: #{tpu_custom_call.1} parent=5 // pred_check
        _
      $region10: #{tpu_custom_call.1} parent=5 // pred_check_branch
        %207 = sbr.rel (%p204) target = $region12
      $region11: #{tpu_custom_call.1} parent=5 // pred_region
        %s208 = ssub.s32 %s16, 1
        // Predicated region
        $region13: #{tpu_custom_call.1} parent=11 // pred_check
          %p209 = pneg %p63
        $region14: #{tpu_custom_call.1} parent=11 // pred_check_branch
          %211 = sbr.rel (%p209) target = $region16
        $region15: #{tpu_custom_call.1} parent=11 // pred_region
          _
        $region16: #{tpu_custom_call.1} parent=11 // pred_fallthru
          _
        // Predicated region
        $region17: #{tpu_custom_call.1} parent=11 // pred_check
          %p212 = pneg %p84
        $region18: #{tpu_custom_call.1} parent=11 // pred_check_branch
          %214 = sbr.rel (%p212) target = $region20
        $region19: #{tpu_custom_call.1} parent=11 // pred_region
          _
        $region20: #{tpu_custom_call.1} parent=11 // pred_fallthru
          _
        // Predicated region
        $region21: #{tpu_custom_call.1} parent=11 // pred_check
          %p215 = pneg %p105
        $region22: #{tpu_custom_call.1} parent=11 // pred_check_branch
          %217 = sbr.rel (%p215) target = $region24
        $region23: #{tpu_custom_call.1} parent=11 // pred_region
          _
        $region24: #{tpu_custom_call.1} parent=11 // pred_fallthru
          _
        // Predicated region
        $region25: #{tpu_custom_call.1} parent=11 // pred_check
          %p218 = pneg %p126
        $region26: #{tpu_custom_call.1} parent=11 // pred_check_branch
          %220 = sbr.rel (%p218) target = $region28
        $region27: #{tpu_custom_call.1} parent=11 // pred_region
          _
        $region28: #{tpu_custom_call.1} parent=11 // pred_fallthru
          _
        // Predicated region
        $region29: #{tpu_custom_call.1} parent=11 // pred_check
          %p221 = pneg %p147
        $region30: #{tpu_custom_call.1} parent=11 // pred_check_branch
          %223 = sbr.rel (%p221) target = $region32
        $region31: #{tpu_custom_call.1} parent=11 // pred_region
          _
        $region32: #{tpu_custom_call.1} parent=11 // pred_fallthru
          _
        // Predicated region
        $region33: #{tpu_custom_call.1} parent=11 // pred_check
          %p224 = pneg %p168
        $region34: #{tpu_custom_call.1} parent=11 // pred_check_branch
          %226 = sbr.rel (%p224) target = $region36
        $region35: #{tpu_custom_call.1} parent=11 // pred_region
          _
        $region36: #{tpu_custom_call.1} parent=11 // pred_fallthru
          _
      $region12: #{tpu_custom_call.1} parent=5 // pred_fallthru
        _
      %p227 = scmp.lt.s32.totalorder %s16, 2
      // Predicated region
      $region37: #{tpu_custom_call.1} parent=5 // pred_check
        %p228 = pneg %p227
      $region38: #{tpu_custom_call.1} parent=5 // pred_check_branch
        %230 = sbr.rel (%p228) target = $region40
      $region39: #{tpu_custom_call.1} parent=5 // pred_region
        // Predicated region
        $region41: #{tpu_custom_call.1} parent=39 // pred_check
          %p231 = pneg %p36
        $region42: #{tpu_custom_call.1} parent=39 // pred_check_branch
          %233 = sbr.rel (%p231) target = $region44
        $region43: #{tpu_custom_call.1} parent=39 // pred_region
          %s234 = smul.u32 64, %s16
          %s235 = ssub.s32 125, %s234
          %p236 = scmp.lt.s32.totalorder %s235, 64
          %s237 = scalar_select %p236, %s235, 64
          %s238 = smul.u32 128, %s237
          %p239 = scmp.lt.s32.totalorder %s234, 124
          %s240 = scalar_select %p239, %s234, 124
          %s241 = smul.addr %s240, 8
          %s242 = scalar_lea.vmem %s0, %s241
          %s243 = smul.u32 64, %s16
          %s244 = ssub.s32 125, %s243
          %p245 = scmp.lt.s32.totalorder %s244, 64
          %s246 = scalar_select %p245, %s244, 64
          %s247 = smul.u32 128, %s246
        $region44: #{tpu_custom_call.1} parent=39 // pred_fallthru
          _
      $region40: #{tpu_custom_call.1} parent=5 // pred_fallthru
        _
      %p248 = scmp.le.s32.totalorder 1, %s16
      %p249 = scmp.lt.s32.totalorder %s16, 3
      %p250 = pnand %p248, %p249
      %p251 = pneg %p250
      // Predicated region
      $region45: #{tpu_custom_call.1} parent=5 // pred_check
        _
      $region46: #{tpu_custom_call.1} parent=5 // pred_check_branch
        %253 = sbr.rel (%p250) target = $region48
      $region47: #{tpu_custom_call.1} parent=5 // pred_region
        %s254 = ssub.s32 %s16, 1
        %s255 = smul.u32 64, %s21
        %s256 = ssub.s32 125, %s255
        %p257 = scmp.lt.s32.totalorder %s256, 64
        %s258 = scalar_select %p257, %s256, 64
        %s259 = smul.u32 128, %s258
        %p260 = scmp.lt.s32.totalorder %s255, 124
        %s261 = scalar_select %p260, %s255, 124
        %s262 = smul.addr %s261, 8
        %s263 = scalar_lea.vmem %s0, %s262
        %p264 = pneg %p42
        %p265 = pneg %p39
        %p266 = pneg %p63
        %p267 = pneg %p60
        %p268 = pneg %p84
        %p269 = pneg %p81
        %p270 = pneg %p105
        %p271 = pneg %p102
        %p272 = pneg %p126
        %p273 = pneg %p123
        %p274 = pneg %p147
        %p275 = pneg %p144
        %p276 = pneg %p168
        %p277 = pneg %p165
        %p278 = pneg %p194
        %p279 = pneg %p191
        %s280 = sand.u32 %s181, 1
        %s281 = scalar_lea.sflag [#allocation3], %s280
        %s282 = sand.u32 %s181, 1
        %s283 = smul.addr %s282, 256
        %s284 = scalar_lea.vmem [#allocation2], %s283
        %s285 = smul.u32 64, %s21
        %s286 = ssub.s32 125, %s285
        %p287 = scmp.lt.s32.totalorder %s286, 64
        %s288 = scalar_select %p287, %s286, 64
        %s289 = smul.u32 128, %s288
        %p290 = scmp.lt.s32.totalorder %s285, 124
        %s291 = scalar_select %p290, %s285, 124
        %s292 = smul.addr %s291, 8
        %s293 = scalar_lea.vmem %s0, %s292
        %s294 = smul.u32 64, %s21
        %s295 = ssub.s32 125, %s294
        %p296 = scmp.lt.s32.totalorder %s295, 64
        %s297 = scalar_select %p296, %s295, 64
        %s298 = smul.u32 128, %s297
        %s299 = smul.u32 64, %s21
        %s300 = ssub.s32 125, %s299
        %p301 = scmp.lt.s32.totalorder %s300, 64
        %s302 = scalar_select %p301, %s300, 64
        %s303 = smul.u32 64, %s302
        %v305 = vld [vmem:[%s293] sm:$0xff]
        %v306 = vld [vmem:[%s293 + $0x8] sm:$0xff]
        %v307 = vld [vmem:[%s293 + $0x10] sm:$0xff]
        %v308 = vld [vmem:[%s293 + $0x18] sm:$0xff]
        %v309 = vld [vmem:[%s293 + $0x20] sm:$0xff]
        %v310 = vld [vmem:[%s293 + $0x28] sm:$0xff]
        %v311 = vld [vmem:[%s293 + $0x30] sm:$0xff]
        %v312 = vld [vmem:[%s293 + $0x38] sm:$0xff]
        %v313 = vld [vmem:[%s293 + $0x40] sm:$0xff]
        %v314 = vld [vmem:[%s293 + $0x48] sm:$0xff]
        %v315 = vld [vmem:[%s293 + $0x50] sm:$0xff]
        %v316 = vld [vmem:[%s293 + $0x58] sm:$0xff]
        %v317 = vld [vmem:[%s293 + $0x60] sm:$0xff]
        %v318 = vld [vmem:[%s293 + $0x68] sm:$0xff]
        %v319 = vld [vmem:[%s293 + $0x70] sm:$0xff]
        %v320 = vld [vmem:[%s293 + $0x78] sm:$0xff]
        %v321 = vld [vmem:[%s293 + $0x80] sm:$0xff]
        %v322 = vld [vmem:[%s293 + $0x88] sm:$0xff]
        %v323 = vld [vmem:[%s293 + $0x90] sm:$0xff]
        %v324 = vld [vmem:[%s293 + $0x98] sm:$0xff]
        %v325 = vld [vmem:[%s293 + $0xa0] sm:$0xff]
        %v326 = vld [vmem:[%s293 + $0xa8] sm:$0xff]
        %v327 = vld [vmem:[%s293 + $0xb0] sm:$0xff]
        %v328 = vld [vmem:[%s293 + $0xb8] sm:$0xff]
        %v329 = vld [vmem:[%s293 + $0xc0] sm:$0xff]
        %v330 = vld [vmem:[%s293 + $0xc8] sm:$0xff]
        %v331 = vld [vmem:[%s293 + $0xd0] sm:$0xff]
        %v332 = vld [vmem:[%s293 + $0xd8] sm:$0xff]
        %v333 = vld [vmem:[%s293 + $0xe0] sm:$0xff]
        %v334 = vld [vmem:[%s293 + $0xe8] sm:$0xff]
        %v335 = vld [vmem:[%s293 + $0xf0] sm:$0xff]
        %v336 = vld [vmem:[%s293 + $0xf8] sm:$0xff]
        %v337 = vld [vmem:[%s293 + $0x100] sm:$0xff]
        %v338 = vld [vmem:[%s293 + $0x108] sm:$0xff]
        %v339 = vld [vmem:[%s293 + $0x110] sm:$0xff]
        %v340 = vld [vmem:[%s293 + $0x118] sm:$0xff]
        %v341 = vld [vmem:[%s293 + $0x120] sm:$0xff]
        %v342 = vld [vmem:[%s293 + $0x128] sm:$0xff]
        %v343 = vld [vmem:[%s293 + $0x130] sm:$0xff]
        %v344 = vld [vmem:[%s293 + $0x138] sm:$0xff]
        %v345 = vld [vmem:[%s293 + $0x140] sm:$0xff]
        %v346 = vld [vmem:[%s293 + $0x148] sm:$0xff]
        %v347 = vld [vmem:[%s293 + $0x150] sm:$0xff]
        %v348 = vld [vmem:[%s293 + $0x158] sm:$0xff]
        %v349 = vld [vmem:[%s293 + $0x160] sm:$0xff]
        %v350 = vld [vmem:[%s293 + $0x168] sm:$0xff]
        %v351 = vld [vmem:[%s293 + $0x170] sm:$0xff]
        %v352 = vld [vmem:[%s293 + $0x178] sm:$0xff]
        %v353 = vld [vmem:[%s293 + $0x180] sm:$0xff]
        %v354 = vld [vmem:[%s293 + $0x188] sm:$0xff]
        %v355 = vld [vmem:[%s293 + $0x190] sm:$0xff]
        %v356 = vld [vmem:[%s293 + $0x198] sm:$0xff]
        %v357 = vld [vmem:[%s293 + $0x1a0] sm:$0xff]
        %v358 = vld [vmem:[%s293 + $0x1a8] sm:$0xff]
        %v359 = vld [vmem:[%s293 + $0x1b0] sm:$0xff]
        %v360 = vld [vmem:[%s293 + $0x1b8] sm:$0xff]
        %v361 = vld [vmem:[%s293 + $0x1c0] sm:$0xff]
        %v362 = vld [vmem:[%s293 + $0x1c8] sm:$0xff]
        %v363 = vld [vmem:[%s293 + $0x1d0] sm:$0xff]
        %v364 = vld [vmem:[%s293 + $0x1d8] sm:$0xff]
        %v365 = vld [vmem:[%s293 + $0x1e0] sm:$0xff]
        %v366 = vld [vmem:[%s293 + $0x1e8] sm:$0xff]
        %v367 = vld [vmem:[%s293 + $0x1f0] sm:$0xff]
        %v368 = vld [vmem:[%s293 + $0x1f8] sm:$0xff]
        %v369 = vpack.c.bf16 %v306, %v305
        %v370 = vpack.c.bf16 %v308, %v307
        %v371 = vpack.c.bf16 %v310, %v309
        %v372 = vpack.c.bf16 %v312, %v311
        %v373 = vpack.c.bf16 %v314, %v313
        %v374 = vpack.c.bf16 %v316, %v315
        %v375 = vpack.c.bf16 %v318, %v317
        %v376 = vpack.c.bf16 %v320, %v319
        %v377 = vpack.c.bf16 %v322, %v321
        %v378 = vpack.c.bf16 %v324, %v323
        %v379 = vpack.c.bf16 %v326, %v325
        %v380 = vpack.c.bf16 %v328, %v327
        %v381 = vpack.c.bf16 %v330, %v329
        %v382 = vpack.c.bf16 %v332, %v331
        %v383 = vpack.c.bf16 %v334, %v333
        %v384 = vpack.c.bf16 %v336, %v335
        %v385 = vpack.c.bf16 %v338, %v337
        %v386 = vpack.c.bf16 %v340, %v339
        %v387 = vpack.c.bf16 %v342, %v341
        %v388 = vpack.c.bf16 %v344, %v343
        %v389 = vpack.c.bf16 %v346, %v345
        %v390 = vpack.c.bf16 %v348, %v347
        %v391 = vpack.c.bf16 %v350, %v349
        %v392 = vpack.c.bf16 %v352, %v351
        %v393 = vpack.c.bf16 %v354, %v353
        %v394 = vpack.c.bf16 %v356, %v355
        %v395 = vpack.c.bf16 %v358, %v357
        %v396 = vpack.c.bf16 %v360, %v359
        %v397 = vpack.c.bf16 %v362, %v361
        %v398 = vpack.c.bf16 %v364, %v363
        %v399 = vpack.c.bf16 %v366, %v365
        %v400 = vpack.c.bf16 %v368, %v367
        %v401 = vld [vmem:[%s1] sm:$0xf]
        %v402 = vld [vmem:[%s1 + $0x4] sm:$0xf]
        %v403 = vld [vmem:[%s1 + $0x8] sm:$0xf]
        %v404 = vld [vmem:[%s1 + $0xc] sm:$0xf]
        %v405 = vld [vmem:[%s2] sm:$0x1]
        %v407 = vlaneseq
        %v408 = vshrl.u32 %v407, 7
        %v409 = vsub.s32 0, %v408
        %v410 = vrot.slane %v405, %v409
        %v416 = vunpack.c.l.b16 %v401
        %v417 = vunpack.c.l.b16 %v402
        %v418 = vunpack.c.l.b16 %v403
        %v419 = vunpack.c.l.b16 %v404
        %v420 = vpack.c.b16 %v417, %v416
        %v421 = vpack.c.b16 %v419, %v418
        %vm424 = vcmask 261120
        %v426 = vsel %vm424, %v369, 0
        %v429 = vsel %vm424, %v370, 0
        %v432 = vsel %vm424, %v371, 0
        %v435 = vsel %vm424, %v372, 0
        %v438 = vsel %vm424, %v373, 0
        %v441 = vsel %vm424, %v374, 0
        %v444 = vsel %vm424, %v375, 0
        %v447 = vsel %vm424, %v376, 0
        %v450 = vsel %vm424, %v377, 0
        %v453 = vsel %vm424, %v378, 0
        %v456 = vsel %vm424, %v379, 0
        %v459 = vsel %vm424, %v380, 0
        %v462 = vsel %vm424, %v381, 0
        %v465 = vsel %vm424, %v382, 0
        %v468 = vsel %vm424, %v383, 0
        %v471 = vsel %vm424, %v384, 0
        %v474 = vsel %vm424, %v385, 0
        %v477 = vsel %vm424, %v386, 0
        %v480 = vsel %vm424, %v387, 0
        %v483 = vsel %vm424, %v388, 0
        %v486 = vsel %vm424, %v389, 0
        %v489 = vsel %vm424, %v390, 0
        %v492 = vsel %vm424, %v391, 0
        %v495 = vsel %vm424, %v392, 0
        %v498 = vsel %vm424, %v393, 0
        %v501 = vsel %vm424, %v394, 0
        %v504 = vsel %vm424, %v395, 0
        %v507 = vsel %vm424, %v396, 0
        %v510 = vsel %vm424, %v397, 0
        %v513 = vsel %vm424, %v398, 0
        %v516 = vsel %vm424, %v399, 0
        %v519 = vsel %vm424, %v400, 0
        %521 = vmatprep.subr.bf16.mxu0 0
        %522 = vmatpush1.bf16.msra.mxu0 %v420
        %523 = vmatprep.subr.bf16.mxu0 0
        %524 = vmatpush1.bf16.msra.mxu0 %v421
        %525 = vmatprep.subr.bf16.mxu0 0
        %526 = vmatpush1.bf16.msra.mxu0 0
        %527 = vmatprep.subr.bf16.mxu0 0
        %528 = vmatpush1.bf16.msra.mxu0 0
        %529 = vmatprep.subr.bf16.mxu0 0
        %530 = vmatpush1.bf16.msra.mxu0 0
        %531 = vmatprep.subr.bf16.mxu0 0
        %532 = vmatpush1.bf16.msra.mxu0 0
        %533 = vmatprep.subr.bf16.mxu0 0
        %534 = vmatpush1.bf16.msra.mxu0 0
        %535 = vmatprep.subr.bf16.mxu0 0
        %536 = vmatpush1.bf16.msra.mxu0 0
        %537 = vmatprep.subr.bf16.mxu0 0
        %538 = vmatpush1.bf16.msra.mxu0 0
        %539 = vmatprep.subr.bf16.mxu0 0
        %540 = vmatpush1.bf16.msra.mxu0 0
        %541 = vmatprep.subr.bf16.mxu0 0
        %542 = vmatpush1.bf16.msra.mxu0 0
        %543 = vmatprep.subr.bf16.mxu0 0
        %544 = vmatpush1.bf16.msra.mxu0 0
        %545 = vmatprep.subr.bf16.mxu0 0
        %546 = vmatpush1.bf16.msra.mxu0 0
        %547 = vmatprep.subr.bf16.mxu0 0
        %548 = vmatpush1.bf16.msra.mxu0 0
        %549 = vmatprep.subr.bf16.mxu0 0
        %550 = vmatpush1.bf16.msra.mxu0 0
        %551 = vmatprep.subr.bf16.mxu0 0
        %552 = vmatpush1.bf16.msra.mxu0 0
        %553 = vmatprep.mubr.bf16.mxu0 0
        %554 = vmatmul.mubr.bf16.gmra.mrb[0].mxu0 %v426
        %v555 = vpop.f32.mrb[0].mxu0
        %v556 = vadd.f32 %v410, %v555
        %v557 = vpop.f32.mrb[0].mxu0
        %v558 = vpop.f32.mrb[0].mxu0
        %v559 = vadd.f32 %v410, %v558
        %v560 = vpop.f32.mrb[0].mxu0
        %561 = vmatprep.mubr.bf16.mxu0 0
        %562 = vmatmul.mubr.bf16.gmra.mrb[0].mxu0 %v429
        %v563 = vpop.f32.mrb[0].mxu0
        %v564 = vadd.f32 %v410, %v563
        %v565 = vpop.f32.mrb[0].mxu0
        %v566 = vpop.f32.mrb[0].mxu0
        %v567 = vadd.f32 %v410, %v566
        %v568 = vpop.f32.mrb[0].mxu0
        %569 = vmatprep.mubr.bf16.mxu0 0
        %570 = vmatmul.mubr.bf16.gmra.mrb[0].mxu0 %v432
        %v571 = vpop.f32.mrb[0].mxu0
        %v572 = vadd.f32 %v410, %v571
        %v573 = vpop.f32.mrb[0].mxu0
        %v574 = vpop.f32.mrb[0].mxu0
        %v575 = vadd.f32 %v410, %v574
        %v576 = vpop.f32.mrb[0].mxu0
        %577 = vmatprep.mubr.bf16.mxu0 0
        %578 = vmatmul.mubr.bf16.gmra.mrb[0].mxu0 %v435
        %v579 = vpop.f32.mrb[0].mxu0
        %v580 = vadd.f32 %v410, %v579
        %v581 = vpop.f32.mrb[0].mxu0
        %v582 = vpop.f32.mrb[0].mxu0
        %v583 = vadd.f32 %v410, %v582
        %v584 = vpop.f32.mrb[0].mxu0
        %585 = vmatprep.mubr.bf16.mxu0 0
        %586 = vmatmul.mubr.bf16.gmra.mrb[0].mxu0 %v438
        %v587 = vpop.f32.mrb[0].mxu0
        %v588 = vadd.f32 %v410, %v587
        %v589 = vpop.f32.mrb[0].mxu0
        %v590 = vpop.f32.mrb[0].mxu0
        %v591 = vadd.f32 %v410, %v590
        %v592 = vpop.f32.mrb[0].mxu0
        %593 = vmatprep.mubr.bf16.mxu0 0
        %594 = vmatmul.mubr.bf16.gmra.mrb[0].mxu0 %v441
        %v595 = vpop.f32.mrb[0].mxu0
        %v596 = vadd.f32 %v410, %v595
        %v597 = vpop.f32.mrb[0].mxu0
        %v598 = vpop.f32.mrb[0].mxu0
        %v599 = vadd.f32 %v410, %v598
        %v600 = vpop.f32.mrb[0].mxu0
        %601 = vmatprep.mubr.bf16.mxu0 0
        %602 = vmatmul.mubr.bf16.gmra.mrb[0].mxu0 %v444
        %v603 = vpop.f32.mrb[0].mxu0
        %v604 = vadd.f32 %v410, %v603
        %v605 = vpop.f32.mrb[0].mxu0
        %v606 = vpop.f32.mrb[0].mxu0
        %v607 = vadd.f32 %v410, %v606
        %v608 = vpop.f32.mrb[0].mxu0
        %609 = vmatprep.mubr.bf16.mxu0 0
        %610 = vmatmul.mubr.bf16.gmra.mrb[0].mxu0 %v447
        %v611 = vpop.f32.mrb[0].mxu0
        %v612 = vadd.f32 %v410, %v611
        %v613 = vpop.f32.mrb[0].mxu0
        %v614 = vpop.f32.mrb[0].mxu0
        %v615 = vadd.f32 %v410, %v614
        %v616 = vpop.f32.mrb[0].mxu0
        %617 = vmatprep.mubr.bf16.mxu0 0
        %618 = vmatmul.mubr.bf16.gmra.mrb[0].mxu0 %v450
        %v619 = vpop.f32.mrb[0].mxu0
        %v620 = vadd.f32 %v410, %v619
        %v621 = vpop.f32.mrb[0].mxu0
        %v622 = vpop.f32.mrb[0].mxu0
        %v623 = vadd.f32 %v410, %v622
        %v624 = vpop.f32.mrb[0].mxu0
        %625 = vmatprep.mubr.bf16.mxu0 0
        %626 = vmatmul.mubr.bf16.gmra.mrb[0].mxu0 %v453
        %v627 = vpop.f32.mrb[0].mxu0
        %v628 = vadd.f32 %v410, %v627
        %v629 = vpop.f32.mrb[0].mxu0
        %v630 = vpop.f32.mrb[0].mxu0
        %v631 = vadd.f32 %v410, %v630
        %v632 = vpop.f32.mrb[0].mxu0
        %633 = vmatprep.mubr.bf16.mxu0 0
        %634 = vmatmul.mubr.bf16.gmra.mrb[0].mxu0 %v456
        %v635 = vpop.f32.mrb[0].mxu0
        %v636 = vadd.f32 %v410, %v635
        %v637 = vpop.f32.mrb[0].mxu0
        %v638 = vpop.f32.mrb[0].mxu0
        %v639 = vadd.f32 %v410, %v638
        %v640 = vpop.f32.mrb[0].mxu0
        %641 = vmatprep.mubr.bf16.mxu0 0
        %642 = vmatmul.mubr.bf16.gmra.mrb[0].mxu0 %v459
        %v643 = vpop.f32.mrb[0].mxu0
        %v644 = vadd.f32 %v410, %v643
        %v645 = vpop.f32.mrb[0].mxu0
        %v646 = vpop.f32.mrb[0].mxu0
        %v647 = vadd.f32 %v410, %v646
        %v648 = vpop.f32.mrb[0].mxu0
        %649 = vmatprep.mubr.bf16.mxu0 0
        %650 = vmatmul.mubr.bf16.gmra.mrb[0].mxu0 %v462
        %v651 = vpop.f32.mrb[0].mxu0
        %v652 = vadd.f32 %v410, %v651
        %v653 = vpop.f32.mrb[0].mxu0
        %v654 = vpop.f32.mrb[0].mxu0
        %v655 = vadd.f32 %v410, %v654
        %v656 = vpop.f32.mrb[0].mxu0
        %657 = vmatprep.mubr.bf16.mxu0 0
        %658 = vmatmul.mubr.bf16.gmra.mrb[0].mxu0 %v465
        %v659 = vpop.f32.mrb[0].mxu0
        %v660 = vadd.f32 %v410, %v659
        %v661 = vpop.f32.mrb[0].mxu0
        %v662 = vpop.f32.mrb[0].mxu0
        %v663 = vadd.f32 %v410, %v662
        %v664 = vpop.f32.mrb[0].mxu0
        %665 = vmatprep.mubr.bf16.mxu0 0
        %666 = vmatmul.mubr.bf16.gmra.mrb[0].mxu0 %v468
        %v667 = vpop.f32.mrb[0].mxu0
        %v668 = vadd.f32 %v410, %v667
        %v669 = vpop.f32.mrb[0].mxu0
        %v670 = vpop.f32.mrb[0].mxu0
        %v671 = vadd.f32 %v410, %v670
        %v672 = vpop.f32.mrb[0].mxu0
        %673 = vmatprep.mubr.bf16.mxu0 0
        %674 = vmatmul.mubr.bf16.gmra.mrb[0].mxu0 %v471
        %v675 = vpop.f32.mrb[0].mxu0
        %v676 = vadd.f32 %v410, %v675
        %v677 = vpop.f32.mrb[0].mxu0
        %v678 = vpop.f32.mrb[0].mxu0
        %v679 = vadd.f32 %v410, %v678
        %v680 = vpop.f32.mrb[0].mxu0
        %681 = vmatprep.mubr.bf16.mxu0 0
        %682 = vmatmul.mubr.bf16.gmra.mrb[0].mxu0 %v474
        %v683 = vpop.f32.mrb[0].mxu0
        %v684 = vadd.f32 %v410, %v683
        %v685 = vpop.f32.mrb[0].mxu0
        %v686 = vpop.f32.mrb[0].mxu0
        %v687 = vadd.f32 %v410, %v686
        %v688 = vpop.f32.mrb[0].mxu0
        %689 = vmatprep.mubr.bf16.mxu0 0
        %690 = vmatmul.mubr.bf16.gmra.mrb[0].mxu0 %v477
        %v691 = vpop.f32.mrb[0].mxu0
        %v692 = vadd.f32 %v410, %v691
        %v693 = vpop.f32.mrb[0].mxu0
        %v694 = vpop.f32.mrb[0].mxu0
        %v695 = vadd.f32 %v410, %v694
        %v696 = vpop.f32.mrb[0].mxu0
        %697 = vmatprep.mubr.bf16.mxu0 0
        %698 = vmatmul.mubr.bf16.gmra.mrb[0].mxu0 %v480
        %v699 = vpop.f32.mrb[0].mxu0
        %v700 = vadd.f32 %v410, %v699
        %v701 = vpop.f32.mrb[0].mxu0
        %v702 = vpop.f32.mrb[0].mxu0
        %v703 = vadd.f32 %v410, %v702
        %v704 = vpop.f32.mrb[0].mxu0
        %705 = vmatprep.mubr.bf16.mxu0 0
        %706 = vmatmul.mubr.bf16.gmra.mrb[0].mxu0 %v483
        %v707 = vpop.f32.mrb[0].mxu0
        %v708 = vadd.f32 %v410, %v707
        %v709 = vpop.f32.mrb[0].mxu0
        %v710 = vpop.f32.mrb[0].mxu0
        %v711 = vadd.f32 %v410, %v710
        %v712 = vpop.f32.mrb[0].mxu0
        %713 = vmatprep.mubr.bf16.mxu0 0
        %714 = vmatmul.mubr.bf16.gmra.mrb[0].mxu0 %v486
        %v715 = vpop.f32.mrb[0].mxu0
        %v716 = vadd.f32 %v410, %v715
        %v717 = vpop.f32.mrb[0].mxu0
        %v718 = vpop.f32.mrb[0].mxu0
        %v719 = vadd.f32 %v410, %v718
        %v720 = vpop.f32.mrb[0].mxu0
        %721 = vmatprep.mubr.bf16.mxu0 0
        %722 = vmatmul.mubr.bf16.gmra.mrb[0].mxu0 %v489
        %v723 = vpop.f32.mrb[0].mxu0
        %v724 = vadd.f32 %v410, %v723
        %v725 = vpop.f32.mrb[0].mxu0
        %v726 = vpop.f32.mrb[0].mxu0
        %v727 = vadd.f32 %v410, %v726
        %v728 = vpop.f32.mrb[0].mxu0
        %729 = vmatprep.mubr.bf16.mxu0 0
        %730 = vmatmul.mubr.bf16.gmra.mrb[0].mxu0 %v492
        %v731 = vpop.f32.mrb[0].mxu0
        %v732 = vadd.f32 %v410, %v731
        %v733 = vpop.f32.mrb[0].mxu0
        %v734 = vpop.f32.mrb[0].mxu0
        %v735 = vadd.f32 %v410, %v734
        %v736 = vpop.f32.mrb[0].mxu0
        %737 = vmatprep.mubr.bf16.mxu0 0
        %738 = vmatmul.mubr.bf16.gmra.mrb[0].mxu0 %v495
        %v739 = vpop.f32.mrb[0].mxu0
        %v740 = vadd.f32 %v410, %v739
        %v741 = vpop.f32.mrb[0].mxu0
        %v742 = vpop.f32.mrb[0].mxu0
        %v743 = vadd.f32 %v410, %v742
        %v744 = vpop.f32.mrb[0].mxu0
        %745 = vmatprep.mubr.bf16.mxu0 0
        %746 = vmatmul.mubr.bf16.gmra.mrb[0].mxu0 %v498
        %v747 = vpop.f32.mrb[0].mxu0
        %v748 = vadd.f32 %v410, %v747
        %v749 = vpop.f32.mrb[0].mxu0
        %v750 = vpop.f32.mrb[0].mxu0
        %v751 = vadd.f32 %v410, %v750
        %v752 = vpop.f32.mrb[0].mxu0
        %753 = vmatprep.mubr.bf16.mxu0 0
        %754 = vmatmul.mubr.bf16.gmra.mrb[0].mxu0 %v501
        %v755 = vpop.f32.mrb[0].mxu0
        %v756 = vadd.f32 %v410, %v755
        %v757 = vpop.f32.mrb[0].mxu0
        %v758 = vpop.f32.mrb[0].mxu0
        %v759 = vadd.f32 %v410, %v758
        %v760 = vpop.f32.mrb[0].mxu0
        %761 = vmatprep.mubr.bf16.mxu0 0
        %762 = vmatmul.mubr.bf16.gmra.mrb[0].mxu0 %v504
        %v763 = vpop.f32.mrb[0].mxu0
        %v764 = vadd.f32 %v410, %v763
        %v765 = vpop.f32.mrb[0].mxu0
        %v766 = vpop.f32.mrb[0].mxu0
        %v767 = vadd.f32 %v410, %v766
        %v768 = vpop.f32.mrb[0].mxu0
        %769 = vmatprep.mubr.bf16.mxu0 0
        %770 = vmatmul.mubr.bf16.gmra.mrb[0].mxu0 %v507
        %v771 = vpop.f32.mrb[0].mxu0
        %v772 = vadd.f32 %v410, %v771
        %v773 = vpop.f32.mrb[0].mxu0
        %v774 = vpop.f32.mrb[0].mxu0
        %v775 = vadd.f32 %v410, %v774
        %v776 = vpop.f32.mrb[0].mxu0
        %777 = vmatprep.mubr.bf16.mxu0 0
        %778 = vmatmul.mubr.bf16.gmra.mrb[0].mxu0 %v510
        %v779 = vpop.f32.mrb[0].mxu0
        %v780 = vadd.f32 %v410, %v779
        %v781 = vpop.f32.mrb[0].mxu0
        %v782 = vpop.f32.mrb[0].mxu0
        %v783 = vadd.f32 %v410, %v782
        %v784 = vpop.f32.mrb[0].mxu0
        %785 = vmatprep.mubr.bf16.mxu0 0
        %786 = vmatmul.mubr.bf16.gmra.mrb[0].mxu0 %v513
        %v787 = vpop.f32.mrb[0].mxu0
        %v788 = vadd.f32 %v410, %v787
        %v789 = vpop.f32.mrb[0].mxu0
        %v790 = vpop.f32.mrb[0].mxu0
        %v791 = vadd.f32 %v410, %v790
        %v792 = vpop.f32.mrb[0].mxu0
        %793 = vmatprep.mubr.bf16.mxu0 0
        %794 = vmatmul.mubr.bf16.gmra.mrb[0].mxu0 %v516
        %v795 = vpop.f32.mrb[0].mxu0
        %v796 = vadd.f32 %v410, %v795
        %v797 = vpop.f32.mrb[0].mxu0
        %v798 = vpop.f32.mrb[0].mxu0
        %v799 = vadd.f32 %v410, %v798
        %v800 = vpop.f32.mrb[0].mxu0
        %801 = vmatprep.mubr.bf16.mxu0 0
        %802 = vmatmul.mubr.bf16.gmra.mrb[0].mxu0 %v519
        %v803 = vpop.f32.mrb[0].mxu0
        %v804 = vadd.f32 %v410, %v803
        %v805 = vpop.f32.mrb[0].mxu0
        %v806 = vpop.f32.mrb[0].mxu0
        %v807 = vadd.f32 %v410, %v806
        %v808 = vpop.f32.mrb[0].mxu0
        %809 = vdwg.mxu0
        %v810 = vmax.f32 %v556, 0.0
        %v811 = vmax.f32 %v559, 0.0
        %v812 = vmax.f32 %v564, 0.0
        %v813 = vmax.f32 %v567, 0.0
        %v814 = vmax.f32 %v572, 0.0
        %v815 = vmax.f32 %v575, 0.0
        %v816 = vmax.f32 %v580, 0.0
        %v817 = vmax.f32 %v583, 0.0
        %v818 = vmax.f32 %v588, 0.0
        %v819 = vmax.f32 %v591, 0.0
        %v820 = vmax.f32 %v596, 0.0
        %v821 = vmax.f32 %v599, 0.0
        %v822 = vmax.f32 %v604, 0.0
        %v823 = vmax.f32 %v607, 0.0
        %v824 = vmax.f32 %v612, 0.0
        %v825 = vmax.f32 %v615, 0.0
        %v826 = vmax.f32 %v620, 0.0
        %v827 = vmax.f32 %v623, 0.0
        %v828 = vmax.f32 %v628, 0.0
        %v829 = vmax.f32 %v631, 0.0
        %v830 = vmax.f32 %v636, 0.0
        %v831 = vmax.f32 %v639, 0.0
        %v832 = vmax.f32 %v644, 0.0
        %v833 = vmax.f32 %v647, 0.0
        %v834 = vmax.f32 %v652, 0.0
        %v835 = vmax.f32 %v655, 0.0
        %v836 = vmax.f32 %v660, 0.0
        %v837 = vmax.f32 %v663, 0.0
        %v838 = vmax.f32 %v668, 0.0
        %v839 = vmax.f32 %v671, 0.0
        %v840 = vmax.f32 %v676, 0.0
        %v841 = vmax.f32 %v679, 0.0
        %v842 = vmax.f32 %v684, 0.0
        %v843 = vmax.f32 %v687, 0.0
        %v844 = vmax.f32 %v692, 0.0
        %v845 = vmax.f32 %v695, 0.0
        %v846 = vmax.f32 %v700, 0.0
        %v847 = vmax.f32 %v703, 0.0
        %v848 = vmax.f32 %v708, 0.0
        %v849 = vmax.f32 %v711, 0.0
        %v850 = vmax.f32 %v716, 0.0
        %v851 = vmax.f32 %v719, 0.0
        %v852 = vmax.f32 %v724, 0.0
        %v853 = vmax.f32 %v727, 0.0
        %v854 = vmax.f32 %v732, 0.0
        %v855 = vmax.f32 %v735, 0.0
        %v856 = vmax.f32 %v740, 0.0
        %v857 = vmax.f32 %v743, 0.0
        %v858 = vmax.f32 %v748, 0.0
        %v859 = vmax.f32 %v751, 0.0
        %v860 = vmax.f32 %v756, 0.0
        %v861 = vmax.f32 %v759, 0.0
        %v862 = vmax.f32 %v764, 0.0
        %v863 = vmax.f32 %v767, 0.0
        %v864 = vmax.f32 %v772, 0.0
        %v865 = vmax.f32 %v775, 0.0
        %v866 = vmax.f32 %v780, 0.0
        %v867 = vmax.f32 %v783, 0.0
        %v868 = vmax.f32 %v788, 0.0
        %v869 = vmax.f32 %v791, 0.0
        %v870 = vmax.f32 %v796, 0.0
        %v871 = vmax.f32 %v799, 0.0
        %v872 = vmax.f32 %v804, 0.0
        %v873 = vmax.f32 %v807, 0.0
        %v874 = vpack.c.bf16 %v811, %v810
        %v875 = vpack.c.bf16 %v813, %v812
        %v876 = vpack.c.bf16 %v815, %v814
        %v877 = vpack.c.bf16 %v817, %v816
        %v878 = vpack.c.bf16 %v819, %v818
        %v879 = vpack.c.bf16 %v821, %v820
        %v880 = vpack.c.bf16 %v823, %v822
        %v881 = vpack.c.bf16 %v825, %v824
        %v882 = vpack.c.bf16 %v827, %v826
        %v883 = vpack.c.bf16 %v829, %v828
        %v884 = vpack.c.bf16 %v831, %v830
        %v885 = vpack.c.bf16 %v833, %v832
        %v886 = vpack.c.bf16 %v835, %v834
        %v887 = vpack.c.bf16 %v837, %v836
        %v888 = vpack.c.bf16 %v839, %v838
        %v889 = vpack.c.bf16 %v841, %v840
        %v890 = vpack.c.bf16 %v843, %v842
        %v891 = vpack.c.bf16 %v845, %v844
        %v892 = vpack.c.bf16 %v847, %v846
        %v893 = vpack.c.bf16 %v849, %v848
        %v894 = vpack.c.bf16 %v851, %v850
        %v895 = vpack.c.bf16 %v853, %v852
        %v896 = vpack.c.bf16 %v855, %v854
        %v897 = vpack.c.bf16 %v857, %v856
        %v898 = vpack.c.bf16 %v859, %v858
        %v899 = vpack.c.bf16 %v861, %v860
        %v900 = vpack.c.bf16 %v863, %v862
        %v901 = vpack.c.bf16 %v865, %v864
        %v902 = vpack.c.bf16 %v867, %v866
        %v903 = vpack.c.bf16 %v869, %v868
        %v904 = vpack.c.bf16 %v871, %v870
        %v905 = vpack.c.bf16 %v873, %v872
        %v906 = vld [vmem:[%s3] sm:$0xf]
        %v907 = vld [vmem:[%s3 + $0x4] sm:$0xf]
        %v908 = vld [vmem:[%s3 + $0x8] sm:$0xf]
        %v909 = vld [vmem:[%s3 + $0xc] sm:$0xf]
        %v910 = vld [vmem:[%s3 + $0x10] sm:$0xf]
        %v911 = vld [vmem:[%s3 + $0x14] sm:$0xf]
        %v912 = vld [vmem:[%s3 + $0x18] sm:$0xf]
        %v913 = vld [vmem:[%s3 + $0x1c] sm:$0xf]
        %v914 = vld [vmem:[%s4] sm:$0x1]
        %v916 = vlaneseq
        %v917 = vshrl.u32 %v916, 7
        %v918 = vsub.s32 0, %v917
        %v919 = vrot.slane %v914, %v918
        %v929 = vunpack.c.l.b16 %v906
        %v930 = vunpack.c.l.b16 %v907
        %v931 = vunpack.c.l.b16 %v908
        %v932 = vunpack.c.l.b16 %v909
        %v933 = vunpack.c.l.b16 %v910
        %v934 = vunpack.c.l.b16 %v911
        %v935 = vunpack.c.l.b16 %v912
        %v936 = vunpack.c.l.b16 %v913
        %v937 = vpack.c.b16 %v930, %v929
        %v938 = vpack.c.b16 %v932, %v931
        %v939 = vpack.c.b16 %v934, %v933
        %v940 = vpack.c.b16 %v936, %v935
        %vm945 = vcmask 523264
        %v947 = vsel %vm945, %v874, 0
        %v950 = vsel %vm945, %v875, 0
        %v953 = vsel %vm945, %v876, 0
        %v956 = vsel %vm945, %v877, 0
        %v959 = vsel %vm945, %v878, 0
        %v962 = vsel %vm945, %v879, 0
        %v965 = vsel %vm945, %v880, 0
        %v968 = vsel %vm945, %v881, 0
        %v971 = vsel %vm945, %v882, 0
        %v974 = vsel %vm945, %v883, 0
        %v977 = vsel %vm945, %v884, 0
        %v980 = vsel %vm945, %v885, 0
        %v983 = vsel %vm945, %v886, 0
        %v986 = vsel %vm945, %v887, 0
        %v989 = vsel %vm945, %v888, 0
        %v992 = vsel %vm945, %v889, 0
        %v995 = vsel %vm945, %v890, 0
        %v998 = vsel %vm945, %v891, 0
        %v1001 = vsel %vm945, %v892, 0
        %v1004 = vsel %vm945, %v893, 0
        %v1007 = vsel %vm945, %v894, 0
        %v1010 = vsel %vm945, %v895, 0
        %v1013 = vsel %vm945, %v896, 0
        %v1016 = vsel %vm945, %v897, 0
        %v1019 = vsel %vm945, %v898, 0
        %v1022 = vsel %vm945, %v899, 0
        %v1025 = vsel %vm945, %v900, 0
        %v1028 = vsel %vm945, %v901, 0
        %v1031 = vsel %vm945, %v902, 0
        %v1034 = vsel %vm945, %v903, 0
        %v1037 = vsel %vm945, %v904, 0
        %v1040 = vsel %vm945, %v905, 0
        %1042 = vmatprep.subr.bf16.mxu0 0
        %1043 = vmatpush1.bf16.msra.mxu0 %v937
        %1044 = vmatprep.subr.bf16.mxu0 0
        %1045 = vmatpush1.bf16.msra.mxu0 %v938
        %1046 = vmatprep.subr.bf16.mxu0 0
        %1047 = vmatpush1.bf16.msra.mxu0 %v939
        %1048 = vmatprep.subr.bf16.mxu0 0
        %1049 = vmatpush1.bf16.msra.mxu0 %v940
        %1050 = vmatprep.subr.bf16.mxu0 0
        %1051 = vmatpush1.bf16.msra.mxu0 0
        %1052 = vmatprep.subr.bf16.mxu0 0
        %1053 = vmatpush1.bf16.msra.mxu0 0
        %1054 = vmatprep.subr.bf16.mxu0 0
        %1055 = vmatpush1.bf16.msra.mxu0 0
        %1056 = vmatprep.subr.bf16.mxu0 0
        %1057 = vmatpush1.bf16.msra.mxu0 0
        %1058 = vmatprep.subr.bf16.mxu0 0
        %1059 = vmatpush1.bf16.msra.mxu0 0
        %1060 = vmatprep.subr.bf16.mxu0 0
        %1061 = vmatpush1.bf16.msra.mxu0 0
        %1062 = vmatprep.subr.bf16.mxu0 0
        %1063 = vmatpush1.bf16.msra.mxu0 0
        %1064 = vmatprep.subr.bf16.mxu0 0
        %1065 = vmatpush1.bf16.msra.mxu0 0
        %1066 = vmatprep.subr.bf16.mxu0 0
        %1067 = vmatpush1.bf16.msra.mxu0 0
        %1068 = vmatprep.subr.bf16.mxu0 0
        %1069 = vmatpush1.bf16.msra.mxu0 0
        %1070 = vmatprep.subr.bf16.mxu0 0
        %1071 = vmatpush1.bf16.msra.mxu0 0
        %1072 = vmatprep.subr.bf16.mxu0 0
        %1073 = vmatpush1.bf16.msra.mxu0 0
        %1074 = vmatprep.mubr.bf16.mxu0 0
        %1075 = vmatmul.mubr.bf16.gmra.mrb[0].mxu0 %v947
        %v1076 = vpop.f32.mrb[0].mxu0
        %v1077 = vadd.f32 %v919, %v1076
        %v1078 = vpop.f32.mrb[0].mxu0
        %v1079 = vpop.f32.mrb[0].mxu0
        %v1080 = vadd.f32 %v919, %v1079
        %v1081 = vpop.f32.mrb[0].mxu0
        %1082 = vmatprep.mubr.bf16.mxu0 0
        %1083 = vmatmul.mubr.bf16.gmra.mrb[0].mxu0 %v950
        %v1084 = vpop.f32.mrb[0].mxu0
        %v1085 = vadd.f32 %v919, %v1084
        %v1086 = vpop.f32.mrb[0].mxu0
        %v1087 = vpop.f32.mrb[0].mxu0
        %v1088 = vadd.f32 %v919, %v1087
        %v1089 = vpop.f32.mrb[0].mxu0
        %1090 = vmatprep.mubr.bf16.mxu0 0
        %1091 = vmatmul.mubr.bf16.gmra.mrb[0].mxu0 %v953
        %v1092 = vpop.f32.mrb[0].mxu0
        %v1093 = vadd.f32 %v919, %v1092
        %v1094 = vpop.f32.mrb[0].mxu0
        %v1095 = vpop.f32.mrb[0].mxu0
        %v1096 = vadd.f32 %v919, %v1095
        %v1097 = vpop.f32.mrb[0].mxu0
        %1098 = vmatprep.mubr.bf16.mxu0 0
        %1099 = vmatmul.mubr.bf16.gmra.mrb[0].mxu0 %v956
        %v1100 = vpop.f32.mrb[0].mxu0
        %v1101 = vadd.f32 %v919, %v1100
        %v1102 = vpop.f32.mrb[0].mxu0
        %v1103 = vpop.f32.mrb[0].mxu0
        %v1104 = vadd.f32 %v919, %v1103
        %v1105 = vpop.f32.mrb[0].mxu0
        %1106 = vmatprep.mubr.bf16.mxu0 0
        %1107 = vmatmul.mubr.bf16.gmra.mrb[0].mxu0 %v959
        %v1108 = vpop.f32.mrb[0].mxu0
        %v1109 = vadd.f32 %v919, %v1108
        %v1110 = vpop.f32.mrb[0].mxu0
        %v1111 = vpop.f32.mrb[0].mxu0
        %v1112 = vadd.f32 %v919, %v1111
        %v1113 = vpop.f32.mrb[0].mxu0
        %1114 = vmatprep.mubr.bf16.mxu0 0
        %1115 = vmatmul.mubr.bf16.gmra.mrb[0].mxu0 %v962
        %v1116 = vpop.f32.mrb[0].mxu0
        %v1117 = vadd.f32 %v919, %v1116
        %v1118 = vpop.f32.mrb[0].mxu0
        %v1119 = vpop.f32.mrb[0].mxu0
        %v1120 = vadd.f32 %v919, %v1119
        %v1121 = vpop.f32.mrb[0].mxu0
        %1122 = vmatprep.mubr.bf16.mxu0 0
        %1123 = vmatmul.mubr.bf16.gmra.mrb[0].mxu0 %v965
        %v1124 = vpop.f32.mrb[0].mxu0
        %v1125 = vadd.f32 %v919, %v1124
        %v1126 = vpop.f32.mrb[0].mxu0
        %v1127 = vpop.f32.mrb[0].mxu0
        %v1128 = vadd.f32 %v919, %v1127
        %v1129 = vpop.f32.mrb[0].mxu0
        %1130 = vmatprep.mubr.bf16.mxu0 0
        %1131 = vmatmul.mubr.bf16.gmra.mrb[0].mxu0 %v968
        %v1132 = vpop.f32.mrb[0].mxu0
        %v1133 = vadd.f32 %v919, %v1132
        %v1134 = vpop.f32.mrb[0].mxu0
        %v1135 = vpop.f32.mrb[0].mxu0
        %v1136 = vadd.f32 %v919, %v1135
        %v1137 = vpop.f32.mrb[0].mxu0
        %1138 = vmatprep.mubr.bf16.mxu0 0
        %1139 = vmatmul.mubr.bf16.gmra.mrb[0].mxu0 %v971
        %v1140 = vpop.f32.mrb[0].mxu0
        %v1141 = vadd.f32 %v919, %v1140
        %v1142 = vpop.f32.mrb[0].mxu0
        %v1143 = vpop.f32.mrb[0].mxu0
        %v1144 = vadd.f32 %v919, %v1143
        %v1145 = vpop.f32.mrb[0].mxu0
        %1146 = vmatprep.mubr.bf16.mxu0 0
        %1147 = vmatmul.mubr.bf16.gmra.mrb[0].mxu0 %v974
        %v1148 = vpop.f32.mrb[0].mxu0
        %v1149 = vadd.f32 %v919, %v1148
        %v1150 = vpop.f32.mrb[0].mxu0
        %v1151 = vpop.f32.mrb[0].mxu0
        %v1152 = vadd.f32 %v919, %v1151
        %v1153 = vpop.f32.mrb[0].mxu0
        %1154 = vmatprep.mubr.bf16.mxu0 0
        %1155 = vmatmul.mubr.bf16.gmra.mrb[0].mxu0 %v977
        %v1156 = vpop.f32.mrb[0].mxu0
        %v1157 = vadd.f32 %v919, %v1156
        %v1158 = vpop.f32.mrb[0].mxu0
        %v1159 = vpop.f32.mrb[0].mxu0
        %v1160 = vadd.f32 %v919, %v1159
        %v1161 = vpop.f32.mrb[0].mxu0
        %1162 = vmatprep.mubr.bf16.mxu0 0
        %1163 = vmatmul.mubr.bf16.gmra.mrb[0].mxu0 %v980
        %v1164 = vpop.f32.mrb[0].mxu0
        %v1165 = vadd.f32 %v919, %v1164
        %v1166 = vpop.f32.mrb[0].mxu0
        %v1167 = vpop.f32.mrb[0].mxu0
        %v1168 = vadd.f32 %v919, %v1167
        %v1169 = vpop.f32.mrb[0].mxu0
        %1170 = vmatprep.mubr.bf16.mxu0 0
        %1171 = vmatmul.mubr.bf16.gmra.mrb[0].mxu0 %v983
        %v1172 = vpop.f32.mrb[0].mxu0
        %v1173 = vadd.f32 %v919, %v1172
        %v1174 = vpop.f32.mrb[0].mxu0
        %v1175 = vpop.f32.mrb[0].mxu0
        %v1176 = vadd.f32 %v919, %v1175
        %v1177 = vpop.f32.mrb[0].mxu0
        %1178 = vmatprep.mubr.bf16.mxu0 0
        %1179 = vmatmul.mubr.bf16.gmra.mrb[0].mxu0 %v986
        %v1180 = vpop.f32.mrb[0].mxu0
        %v1181 = vadd.f32 %v919, %v1180
        %v1182 = vpop.f32.mrb[0].mxu0
        %v1183 = vpop.f32.mrb[0].mxu0
        %v1184 = vadd.f32 %v919, %v1183
        %v1185 = vpop.f32.mrb[0].mxu0
        %1186 = vmatprep.mubr.bf16.mxu0 0
        %1187 = vmatmul.mubr.bf16.gmra.mrb[0].mxu0 %v989
        %v1188 = vpop.f32.mrb[0].mxu0
        %v1189 = vadd.f32 %v919, %v1188
        %v1190 = vpop.f32.mrb[0].mxu0
        %v1191 = vpop.f32.mrb[0].mxu0
        %v1192 = vadd.f32 %v919, %v1191
        %v1193 = vpop.f32.mrb[0].mxu0
        %1194 = vmatprep.mubr.bf16.mxu0 0
        %1195 = vmatmul.mubr.bf16.gmra.mrb[0].mxu0 %v992
        %v1196 = vpop.f32.mrb[0].mxu0
        %v1197 = vadd.f32 %v919, %v1196
        %v1198 = vpop.f32.mrb[0].mxu0
        %v1199 = vpop.f32.mrb[0].mxu0
        %v1200 = vadd.f32 %v919, %v1199
        %v1201 = vpop.f32.mrb[0].mxu0
        %1202 = vmatprep.mubr.bf16.mxu0 0
        %1203 = vmatmul.mubr.bf16.gmra.mrb[0].mxu0 %v995
        %v1204 = vpop.f32.mrb[0].mxu0
        %v1205 = vadd.f32 %v919, %v1204
        %v1206 = vpop.f32.mrb[0].mxu0
        %v1207 = vpop.f32.mrb[0].mxu0
        %v1208 = vadd.f32 %v919, %v1207
        %v1209 = vpop.f32.mrb[0].mxu0
        %1210 = vmatprep.mubr.bf16.mxu0 0
        %1211 = vmatmul.mubr.bf16.gmra.mrb[0].mxu0 %v998
        %v1212 = vpop.f32.mrb[0].mxu0
        %v1213 = vadd.f32 %v919, %v1212
        %v1214 = vpop.f32.mrb[0].mxu0
        %v1215 = vpop.f32.mrb[0].mxu0
        %v1216 = vadd.f32 %v919, %v1215
        %v1217 = vpop.f32.mrb[0].mxu0
        %1218 = vmatprep.mubr.bf16.mxu0 0
        %1219 = vmatmul.mubr.bf16.gmra.mrb[0].mxu0 %v1001
        %v1220 = vpop.f32.mrb[0].mxu0
        %v1221 = vadd.f32 %v919, %v1220
        %v1222 = vpop.f32.mrb[0].mxu0
        %v1223 = vpop.f32.mrb[0].mxu0
        %v1224 = vadd.f32 %v919, %v1223
        %v1225 = vpop.f32.mrb[0].mxu0
        %1226 = vmatprep.mubr.bf16.mxu0 0
        %1227 = vmatmul.mubr.bf16.gmra.mrb[0].mxu0 %v1004
        %v1228 = vpop.f32.mrb[0].mxu0
        %v1229 = vadd.f32 %v919, %v1228
        %v1230 = vpop.f32.mrb[0].mxu0
        %v1231 = vpop.f32.mrb[0].mxu0
        %v1232 = vadd.f32 %v919, %v1231
        %v1233 = vpop.f32.mrb[0].mxu0
        %1234 = vmatprep.mubr.bf16.mxu0 0
        %1235 = vmatmul.mubr.bf16.gmra.mrb[0].mxu0 %v1007
        %v1236 = vpop.f32.mrb[0].mxu0
        %v1237 = vadd.f32 %v919, %v1236
        %v1238 = vpop.f32.mrb[0].mxu0
        %v1239 = vpop.f32.mrb[0].mxu0
        %v1240 = vadd.f32 %v919, %v1239
        %v1241 = vpop.f32.mrb[0].mxu0
        %1242 = vmatprep.mubr.bf16.mxu0 0
        %1243 = vmatmul.mubr.bf16.gmra.mrb[0].mxu0 %v1010
        %v1244 = vpop.f32.mrb[0].mxu0
        %v1245 = vadd.f32 %v919, %v1244
        %v1246 = vpop.f32.mrb[0].mxu0
        %v1247 = vpop.f32.mrb[0].mxu0
        %v1248 = vadd.f32 %v919, %v1247
        %v1249 = vpop.f32.mrb[0].mxu0
        %1250 = vmatprep.mubr.bf16.mxu0 0
        %1251 = vmatmul.mubr.bf16.gmra.mrb[0].mxu0 %v1013
        %v1252 = vpop.f32.mrb[0].mxu0
        %v1253 = vadd.f32 %v919, %v1252
        %v1254 = vpop.f32.mrb[0].mxu0
        %v1255 = vpop.f32.mrb[0].mxu0
        %v1256 = vadd.f32 %v919, %v1255
        %v1257 = vpop.f32.mrb[0].mxu0
        %1258 = vmatprep.mubr.bf16.mxu0 0
        %1259 = vmatmul.mubr.bf16.gmra.mrb[0].mxu0 %v1016
        %v1260 = vpop.f32.mrb[0].mxu0
        %v1261 = vadd.f32 %v919, %v1260
        %v1262 = vpop.f32.mrb[0].mxu0
        %v1263 = vpop.f32.mrb[0].mxu0
        %v1264 = vadd.f32 %v919, %v1263
        %v1265 = vpop.f32.mrb[0].mxu0
        %1266 = vmatprep.mubr.bf16.mxu0 0
        %1267 = vmatmul.mubr.bf16.gmra.mrb[0].mxu0 %v1019
        %v1268 = vpop.f32.mrb[0].mxu0
        %v1269 = vadd.f32 %v919, %v1268
        %v1270 = vpop.f32.mrb[0].mxu0
        %v1271 = vpop.f32.mrb[0].mxu0
        %v1272 = vadd.f32 %v919, %v1271
        %v1273 = vpop.f32.mrb[0].mxu0
        %1274 = vmatprep.mubr.bf16.mxu0 0
        %1275 = vmatmul.mubr.bf16.gmra.mrb[0].mxu0 %v1022
        %v1276 = vpop.f32.mrb[0].mxu0
        %v1277 = vadd.f32 %v919, %v1276
        %v1278 = vpop.f32.mrb[0].mxu0
        %v1279 = vpop.f32.mrb[0].mxu0
        %v1280 = vadd.f32 %v919, %v1279
        %v1281 = vpop.f32.mrb[0].mxu0
        %1282 = vmatprep.mubr.bf16.mxu0 0
        %1283 = vmatmul.mubr.bf16.gmra.mrb[0].mxu0 %v1025
        %v1284 = vpop.f32.mrb[0].mxu0
        %v1285 = vadd.f32 %v919, %v1284
        %v1286 = vpop.f32.mrb[0].mxu0
        %v1287 = vpop.f32.mrb[0].mxu0
        %v1288 = vadd.f32 %v919, %v1287
        %v1289 = vpop.f32.mrb[0].mxu0
        %1290 = vmatprep.mubr.bf16.mxu0 0
        %1291 = vmatmul.mubr.bf16.gmra.mrb[0].mxu0 %v1028
        %v1292 = vpop.f32.mrb[0].mxu0
        %v1293 = vadd.f32 %v919, %v1292
        %v1294 = vpop.f32.mrb[0].mxu0
        %v1295 = vpop.f32.mrb[0].mxu0
        %v1296 = vadd.f32 %v919, %v1295
        %v1297 = vpop.f32.mrb[0].mxu0
        %1298 = vmatprep.mubr.bf16.mxu0 0
        %1299 = vmatmul.mubr.bf16.gmra.mrb[0].mxu0 %v1031
        %v1300 = vpop.f32.mrb[0].mxu0
        %v1301 = vadd.f32 %v919, %v1300
        %v1302 = vpop.f32.mrb[0].mxu0
        %v1303 = vpop.f32.mrb[0].mxu0
        %v1304 = vadd.f32 %v919, %v1303
        %v1305 = vpop.f32.mrb[0].mxu0
        %1306 = vmatprep.mubr.bf16.mxu0 0
        %1307 = vmatmul.mubr.bf16.gmra.mrb[0].mxu0 %v1034
        %v1308 = vpop.f32.mrb[0].mxu0
        %v1309 = vadd.f32 %v919, %v1308
        %v1310 = vpop.f32.mrb[0].mxu0
        %v1311 = vpop.f32.mrb[0].mxu0
        %v1312 = vadd.f32 %v919, %v1311
        %v1313 = vpop.f32.mrb[0].mxu0
        %1314 = vmatprep.mubr.bf16.mxu0 0
        %1315 = vmatmul.mubr.bf16.gmra.mrb[0].mxu0 %v1037
        %v1316 = vpop.f32.mrb[0].mxu0
        %v1317 = vadd.f32 %v919, %v1316
        %v1318 = vpop.f32.mrb[0].mxu0
        %v1319 = vpop.f32.mrb[0].mxu0
        %v1320 = vadd.f32 %v919, %v1319
        %v1321 = vpop.f32.mrb[0].mxu0
        %1322 = vmatprep.mubr.bf16.mxu0 0
        %1323 = vmatmul.mubr.bf16.gmra.mrb[0].mxu0 %v1040
        %v1324 = vpop.f32.mrb[0].mxu0
        %v1325 = vadd.f32 %v919, %v1324
        %v1326 = vpop.f32.mrb[0].mxu0
        %v1327 = vpop.f32.mrb[0].mxu0
        %v1328 = vadd.f32 %v919, %v1327
        %v1329 = vpop.f32.mrb[0].mxu0
        %1330 = vdwg.mxu0
        %v1331 = vmax.f32 %v1077, 0.0
        %v1332 = vmax.f32 %v1080, 0.0
        %v1333 = vmax.f32 %v1085, 0.0
        %v1334 = vmax.f32 %v1088, 0.0
        %v1335 = vmax.f32 %v1093, 0.0
        %v1336 = vmax.f32 %v1096, 0.0
        %v1337 = vmax.f32 %v1101, 0.0
        %v1338 = vmax.f32 %v1104, 0.0
        %v1339 = vmax.f32 %v1109, 0.0
        %v1340 = vmax.f32 %v1112, 0.0
        %v1341 = vmax.f32 %v1117, 0.0
        %v1342 = vmax.f32 %v1120, 0.0
        %v1343 = vmax.f32 %v1125, 0.0
        %v1344 = vmax.f32 %v1128, 0.0
        %v1345 = vmax.f32 %v1133, 0.0
        %v1346 = vmax.f32 %v1136, 0.0
        %v1347 = vmax.f32 %v1141, 0.0
        %v1348 = vmax.f32 %v1144, 0.0
        %v1349 = vmax.f32 %v1149, 0.0
        %v1350 = vmax.f32 %v1152, 0.0
        %v1351 = vmax.f32 %v1157, 0.0
        %v1352 = vmax.f32 %v1160, 0.0
        %v1353 = vmax.f32 %v1165, 0.0
        %v1354 = vmax.f32 %v1168, 0.0
        %v1355 = vmax.f32 %v1173, 0.0
        %v1356 = vmax.f32 %v1176, 0.0
        %v1357 = vmax.f32 %v1181, 0.0
        %v1358 = vmax.f32 %v1184, 0.0
        %v1359 = vmax.f32 %v1189, 0.0
        %v1360 = vmax.f32 %v1192, 0.0
        %v1361 = vmax.f32 %v1197, 0.0
        %v1362 = vmax.f32 %v1200, 0.0
        %v1363 = vmax.f32 %v1205, 0.0
        %v1364 = vmax.f32 %v1208, 0.0
        %v1365 = vmax.f32 %v1213, 0.0
        %v1366 = vmax.f32 %v1216, 0.0
        %v1367 = vmax.f32 %v1221, 0.0
        %v1368 = vmax.f32 %v1224, 0.0
        %v1369 = vmax.f32 %v1229, 0.0
        %v1370 = vmax.f32 %v1232, 0.0
        %v1371 = vmax.f32 %v1237, 0.0
        %v1372 = vmax.f32 %v1240, 0.0
        %v1373 = vmax.f32 %v1245, 0.0
        %v1374 = vmax.f32 %v1248, 0.0
        %v1375 = vmax.f32 %v1253, 0.0
        %v1376 = vmax.f32 %v1256, 0.0
        %v1377 = vmax.f32 %v1261, 0.0
        %v1378 = vmax.f32 %v1264, 0.0
        %v1379 = vmax.f32 %v1269, 0.0
        %v1380 = vmax.f32 %v1272, 0.0
        %v1381 = vmax.f32 %v1277, 0.0
        %v1382 = vmax.f32 %v1280, 0.0
        %v1383 = vmax.f32 %v1285, 0.0
        %v1384 = vmax.f32 %v1288, 0.0
        %v1385 = vmax.f32 %v1293, 0.0
        %v1386 = vmax.f32 %v1296, 0.0
        %v1387 = vmax.f32 %v1301, 0.0
        %v1388 = vmax.f32 %v1304, 0.0
        %v1389 = vmax.f32 %v1309, 0.0
        %v1390 = vmax.f32 %v1312, 0.0
        %v1391 = vmax.f32 %v1317, 0.0
        %v1392 = vmax.f32 %v1320, 0.0
        %v1393 = vmax.f32 %v1325, 0.0
        %v1394 = vmax.f32 %v1328, 0.0
        %v1395 = vpack.c.bf16 %v1332, %v1331
        %v1396 = vpack.c.bf16 %v1334, %v1333
        %v1397 = vpack.c.bf16 %v1336, %v1335
        %v1398 = vpack.c.bf16 %v1338, %v1337
        %v1399 = vpack.c.bf16 %v1340, %v1339
        %v1400 = vpack.c.bf16 %v1342, %v1341
        %v1401 = vpack.c.bf16 %v1344, %v1343
        %v1402 = vpack.c.bf16 %v1346, %v1345
        %v1403 = vpack.c.bf16 %v1348, %v1347
        %v1404 = vpack.c.bf16 %v1350, %v1349
        %v1405 = vpack.c.bf16 %v1352, %v1351
        %v1406 = vpack.c.bf16 %v1354, %v1353
        %v1407 = vpack.c.bf16 %v1356, %v1355
        %v1408 = vpack.c.bf16 %v1358, %v1357
        %v1409 = vpack.c.bf16 %v1360, %v1359
        %v1410 = vpack.c.bf16 %v1362, %v1361
        %v1411 = vpack.c.bf16 %v1364, %v1363
        %v1412 = vpack.c.bf16 %v1366, %v1365
        %v1413 = vpack.c.bf16 %v1368, %v1367
        %v1414 = vpack.c.bf16 %v1370, %v1369
        %v1415 = vpack.c.bf16 %v1372, %v1371
        %v1416 = vpack.c.bf16 %v1374, %v1373
        %v1417 = vpack.c.bf16 %v1376, %v1375
        %v1418 = vpack.c.bf16 %v1378, %v1377
        %v1419 = vpack.c.bf16 %v1380, %v1379
        %v1420 = vpack.c.bf16 %v1382, %v1381
        %v1421 = vpack.c.bf16 %v1384, %v1383
        %v1422 = vpack.c.bf16 %v1386, %v1385
        %v1423 = vpack.c.bf16 %v1388, %v1387
        %v1424 = vpack.c.bf16 %v1390, %v1389
        %v1425 = vpack.c.bf16 %v1392, %v1391
        %v1426 = vpack.c.bf16 %v1394, %v1393
        %v1427 = vld [vmem:[%s5] sm:$0xf]
        %v1428 = vld [vmem:[%s5 + $0x4] sm:$0xf]
        %v1429 = vld [vmem:[%s5 + $0x8] sm:$0xf]
        %v1430 = vld [vmem:[%s5 + $0xc] sm:$0xf]
        %v1431 = vld [vmem:[%s6] sm:$0x1]
        %v1433 = vlaneseq
        %v1434 = vshrl.u32 %v1433, 7
        %v1435 = vsub.s32 0, %v1434
        %v1436 = vrot.slane %v1431, %v1435
        %v1442 = vunpack.c.l.b16 %v1427
        %v1443 = vunpack.c.l.b16 %v1428
        %v1444 = vunpack.c.l.b16 %v1429
        %v1445 = vunpack.c.l.b16 %v1430
        %v1446 = vpack.c.b16 %v1443, %v1442
        %v1447 = vpack.c.b16 %v1445, %v1444
        %v1451 = vsel %vm424, %v1395, 0
        %v1454 = vsel %vm424, %v1396, 0
        %v1457 = vsel %vm424, %v1397, 0
        %v1460 = vsel %vm424, %v1398, 0
        %v1463 = vsel %vm424, %v1399, 0
        %v1466 = vsel %vm424, %v1400, 0
        %v1469 = vsel %vm424, %v1401, 0
        %v1472 = vsel %vm424, %v1402, 0
        %v1475 = vsel %vm424, %v1403, 0
        %v1478 = vsel %vm424, %v1404, 0
        %v1481 = vsel %vm424, %v1405, 0
        %v1484 = vsel %vm424, %v1406, 0
        %v1487 = vsel %vm424, %v1407, 0
        %v1490 = vsel %vm424, %v1408, 0
        %v1493 = vsel %vm424, %v1409, 0
        %v1496 = vsel %vm424, %v1410, 0
        %v1499 = vsel %vm424, %v1411, 0
        %v1502 = vsel %vm424, %v1412, 0
        %v1505 = vsel %vm424, %v1413, 0
        %v1508 = vsel %vm424, %v1414, 0
        %v1511 = vsel %vm424, %v1415, 0
        %v1514 = vsel %vm424, %v1416, 0
        %v1517 = vsel %vm424, %v1417, 0
        %v1520 = vsel %vm424, %v1418, 0
        %v1523 = vsel %vm424, %v1419, 0
        %v1526 = vsel %vm424, %v1420, 0
        %v1529 = vsel %vm424, %v1421, 0
        %v1532 = vsel %vm424, %v1422, 0
        %v1535 = vsel %vm424, %v1423, 0
        %v1538 = vsel %vm424, %v1424, 0
        %v1541 = vsel %vm424, %v1425, 0
        %v1544 = vsel %vm424, %v1426, 0
        %1546 = vmatprep.subr.bf16.mxu0 0
        %1547 = vmatpush1.bf16.msra.mxu0 %v1446
        %1548 = vmatprep.subr.bf16.mxu0 0
        %1549 = vmatpush1.bf16.msra.mxu0 %v1447
        %1550 = vmatprep.subr.bf16.mxu0 0
        %1551 = vmatpush1.bf16.msra.mxu0 0
        %1552 = vmatprep.subr.bf16.mxu0 0
        %1553 = vmatpush1.bf16.msra.mxu0 0
        %1554 = vmatprep.subr.bf16.mxu0 0
        %1555 = vmatpush1.bf16.msra.mxu0 0
        %1556 = vmatprep.subr.bf16.mxu0 0
        %1557 = vmatpush1.bf16.msra.mxu0 0
        %1558 = vmatprep.subr.bf16.mxu0 0
        %1559 = vmatpush1.bf16.msra.mxu0 0
        %1560 = vmatprep.subr.bf16.mxu0 0
        %1561 = vmatpush1.bf16.msra.mxu0 0
        %1562 = vmatprep.subr.bf16.mxu0 0
        %1563 = vmatpush1.bf16.msra.mxu0 0
        %1564 = vmatprep.subr.bf16.mxu0 0
        %1565 = vmatpush1.bf16.msra.mxu0 0
        %1566 = vmatprep.subr.bf16.mxu0 0
        %1567 = vmatpush1.bf16.msra.mxu0 0
        %1568 = vmatprep.subr.bf16.mxu0 0
        %1569 = vmatpush1.bf16.msra.mxu0 0
        %1570 = vmatprep.subr.bf16.mxu0 0
        %1571 = vmatpush1.bf16.msra.mxu0 0
        %1572 = vmatprep.subr.bf16.mxu0 0
        %1573 = vmatpush1.bf16.msra.mxu0 0
        %1574 = vmatprep.subr.bf16.mxu0 0
        %1575 = vmatpush1.bf16.msra.mxu0 0
        %1576 = vmatprep.subr.bf16.mxu0 0
        %1577 = vmatpush1.bf16.msra.mxu0 0
        %1578 = vmatprep.mubr.bf16.mxu0 0
        %1579 = vmatmul.mubr.bf16.gmra.mrb[0].mxu0 %v1451
        %v1580 = vpop.f32.mrb[0].mxu0
        %v1581 = vadd.f32 %v1436, %v1580
        %v1582 = vpop.f32.mrb[0].mxu0
        %v1583 = vpop.f32.mrb[0].mxu0
        %v1584 = vadd.f32 %v1436, %v1583
        %v1585 = vpop.f32.mrb[0].mxu0
        %1586 = vmatprep.mubr.bf16.mxu0 0
        %1587 = vmatmul.mubr.bf16.gmra.mrb[0].mxu0 %v1454
        %v1588 = vpop.f32.mrb[0].mxu0
        %v1589 = vadd.f32 %v1436, %v1588
        %v1590 = vpop.f32.mrb[0].mxu0
        %v1591 = vpop.f32.mrb[0].mxu0
        %v1592 = vadd.f32 %v1436, %v1591
        %v1593 = vpop.f32.mrb[0].mxu0
        %1594 = vmatprep.mubr.bf16.mxu0 0
        %1595 = vmatmul.mubr.bf16.gmra.mrb[0].mxu0 %v1457
        %v1596 = vpop.f32.mrb[0].mxu0
        %v1597 = vadd.f32 %v1436, %v1596
        %v1598 = vpop.f32.mrb[0].mxu0
        %v1599 = vpop.f32.mrb[0].mxu0
        %v1600 = vadd.f32 %v1436, %v1599
        %v1601 = vpop.f32.mrb[0].mxu0
        %1602 = vmatprep.mubr.bf16.mxu0 0
        %1603 = vmatmul.mubr.bf16.gmra.mrb[0].mxu0 %v1460
        %v1604 = vpop.f32.mrb[0].mxu0
        %v1605 = vadd.f32 %v1436, %v1604
        %v1606 = vpop.f32.mrb[0].mxu0
        %v1607 = vpop.f32.mrb[0].mxu0
        %v1608 = vadd.f32 %v1436, %v1607
        %v1609 = vpop.f32.mrb[0].mxu0
        %1610 = vmatprep.mubr.bf16.mxu0 0
        %1611 = vmatmul.mubr.bf16.gmra.mrb[0].mxu0 %v1463
        %v1612 = vpop.f32.mrb[0].mxu0
        %v1613 = vadd.f32 %v1436, %v1612
        %v1614 = vpop.f32.mrb[0].mxu0
        %v1615 = vpop.f32.mrb[0].mxu0
        %v1616 = vadd.f32 %v1436, %v1615
        %v1617 = vpop.f32.mrb[0].mxu0
        %1618 = vmatprep.mubr.bf16.mxu0 0
        %1619 = vmatmul.mubr.bf16.gmra.mrb[0].mxu0 %v1466
        %v1620 = vpop.f32.mrb[0].mxu0
        %v1621 = vadd.f32 %v1436, %v1620
        %v1622 = vpop.f32.mrb[0].mxu0
        %v1623 = vpop.f32.mrb[0].mxu0
        %v1624 = vadd.f32 %v1436, %v1623
        %v1625 = vpop.f32.mrb[0].mxu0
        %1626 = vmatprep.mubr.bf16.mxu0 0
        %1627 = vmatmul.mubr.bf16.gmra.mrb[0].mxu0 %v1469
        %v1628 = vpop.f32.mrb[0].mxu0
        %v1629 = vadd.f32 %v1436, %v1628
        %v1630 = vpop.f32.mrb[0].mxu0
        %v1631 = vpop.f32.mrb[0].mxu0
        %v1632 = vadd.f32 %v1436, %v1631
        %v1633 = vpop.f32.mrb[0].mxu0
        %1634 = vmatprep.mubr.bf16.mxu0 0
        %1635 = vmatmul.mubr.bf16.gmra.mrb[0].mxu0 %v1472
        %v1636 = vpop.f32.mrb[0].mxu0
        %v1637 = vadd.f32 %v1436, %v1636
        %v1638 = vpop.f32.mrb[0].mxu0
        %v1639 = vpop.f32.mrb[0].mxu0
        %v1640 = vadd.f32 %v1436, %v1639
        %v1641 = vpop.f32.mrb[0].mxu0
        %1642 = vmatprep.mubr.bf16.mxu0 0
        %1643 = vmatmul.mubr.bf16.gmra.mrb[0].mxu0 %v1475
        %v1644 = vpop.f32.mrb[0].mxu0
        %v1645 = vadd.f32 %v1436, %v1644
        %v1646 = vpop.f32.mrb[0].mxu0
        %v1647 = vpop.f32.mrb[0].mxu0
        %v1648 = vadd.f32 %v1436, %v1647
        %v1649 = vpop.f32.mrb[0].mxu0
        %1650 = vmatprep.mubr.bf16.mxu0 0
        %1651 = vmatmul.mubr.bf16.gmra.mrb[0].mxu0 %v1478
        %v1652 = vpop.f32.mrb[0].mxu0
        %v1653 = vadd.f32 %v1436, %v1652
        %v1654 = vpop.f32.mrb[0].mxu0
        %v1655 = vpop.f32.mrb[0].mxu0
        %v1656 = vadd.f32 %v1436, %v1655
        %v1657 = vpop.f32.mrb[0].mxu0
        %1658 = vmatprep.mubr.bf16.mxu0 0
        %1659 = vmatmul.mubr.bf16.gmra.mrb[0].mxu0 %v1481
        %v1660 = vpop.f32.mrb[0].mxu0
        %v1661 = vadd.f32 %v1436, %v1660
        %v1662 = vpop.f32.mrb[0].mxu0
        %v1663 = vpop.f32.mrb[0].mxu0
        %v1664 = vadd.f32 %v1436, %v1663
        %v1665 = vpop.f32.mrb[0].mxu0
        %1666 = vmatprep.mubr.bf16.mxu0 0
        %1667 = vmatmul.mubr.bf16.gmra.mrb[0].mxu0 %v1484
        %v1668 = vpop.f32.mrb[0].mxu0
        %v1669 = vadd.f32 %v1436, %v1668
        %v1670 = vpop.f32.mrb[0].mxu0
        %v1671 = vpop.f32.mrb[0].mxu0
        %v1672 = vadd.f32 %v1436, %v1671
        %v1673 = vpop.f32.mrb[0].mxu0
        %1674 = vmatprep.mubr.bf16.mxu0 0
        %1675 = vmatmul.mubr.bf16.gmra.mrb[0].mxu0 %v1487
        %v1676 = vpop.f32.mrb[0].mxu0
        %v1677 = vadd.f32 %v1436, %v1676
        %v1678 = vpop.f32.mrb[0].mxu0
        %v1679 = vpop.f32.mrb[0].mxu0
        %v1680 = vadd.f32 %v1436, %v1679
        %v1681 = vpop.f32.mrb[0].mxu0
        %1682 = vmatprep.mubr.bf16.mxu0 0
        %1683 = vmatmul.mubr.bf16.gmra.mrb[0].mxu0 %v1490
        %v1684 = vpop.f32.mrb[0].mxu0
        %v1685 = vadd.f32 %v1436, %v1684
        %v1686 = vpop.f32.mrb[0].mxu0
        %v1687 = vpop.f32.mrb[0].mxu0
        %v1688 = vadd.f32 %v1436, %v1687
        %v1689 = vpop.f32.mrb[0].mxu0
        %1690 = vmatprep.mubr.bf16.mxu0 0
        %1691 = vmatmul.mubr.bf16.gmra.mrb[0].mxu0 %v1493
        %v1692 = vpop.f32.mrb[0].mxu0
        %v1693 = vadd.f32 %v1436, %v1692
        %v1694 = vpop.f32.mrb[0].mxu0
        %v1695 = vpop.f32.mrb[0].mxu0
        %v1696 = vadd.f32 %v1436, %v1695
        %v1697 = vpop.f32.mrb[0].mxu0
        %1698 = vmatprep.mubr.bf16.mxu0 0
        %1699 = vmatmul.mubr.bf16.gmra.mrb[0].mxu0 %v1496
        %v1700 = vpop.f32.mrb[0].mxu0
        %v1701 = vadd.f32 %v1436, %v1700
        %v1702 = vpop.f32.mrb[0].mxu0
        %v1703 = vpop.f32.mrb[0].mxu0
        %v1704 = vadd.f32 %v1436, %v1703
        %v1705 = vpop.f32.mrb[0].mxu0
        %1706 = vmatprep.mubr.bf16.mxu0 0
        %1707 = vmatmul.mubr.bf16.gmra.mrb[0].mxu0 %v1499
        %v1708 = vpop.f32.mrb[0].mxu0
        %v1709 = vadd.f32 %v1436, %v1708
        %v1710 = vpop.f32.mrb[0].mxu0
        %v1711 = vpop.f32.mrb[0].mxu0
        %v1712 = vadd.f32 %v1436, %v1711
        %v1713 = vpop.f32.mrb[0].mxu0
        %1714 = vmatprep.mubr.bf16.mxu0 0
        %1715 = vmatmul.mubr.bf16.gmra.mrb[0].mxu0 %v1502
        %v1716 = vpop.f32.mrb[0].mxu0
        %v1717 = vadd.f32 %v1436, %v1716
        %v1718 = vpop.f32.mrb[0].mxu0
        %v1719 = vpop.f32.mrb[0].mxu0
        %v1720 = vadd.f32 %v1436, %v1719
        %v1721 = vpop.f32.mrb[0].mxu0
        %1722 = vmatprep.mubr.bf16.mxu0 0
        %1723 = vmatmul.mubr.bf16.gmra.mrb[0].mxu0 %v1505
        %v1724 = vpop.f32.mrb[0].mxu0
        %v1725 = vadd.f32 %v1436, %v1724
        %v1726 = vpop.f32.mrb[0].mxu0
        %v1727 = vpop.f32.mrb[0].mxu0
        %v1728 = vadd.f32 %v1436, %v1727
        %v1729 = vpop.f32.mrb[0].mxu0
        %1730 = vmatprep.mubr.bf16.mxu0 0
        %1731 = vmatmul.mubr.bf16.gmra.mrb[0].mxu0 %v1508
        %v1732 = vpop.f32.mrb[0].mxu0
        %v1733 = vadd.f32 %v1436, %v1732
        %v1734 = vpop.f32.mrb[0].mxu0
        %v1735 = vpop.f32.mrb[0].mxu0
        %v1736 = vadd.f32 %v1436, %v1735
        %v1737 = vpop.f32.mrb[0].mxu0
        %1738 = vmatprep.mubr.bf16.mxu0 0
        %1739 = vmatmul.mubr.bf16.gmra.mrb[0].mxu0 %v1511
        %v1740 = vpop.f32.mrb[0].mxu0
        %v1741 = vadd.f32 %v1436, %v1740
        %v1742 = vpop.f32.mrb[0].mxu0
        %v1743 = vpop.f32.mrb[0].mxu0
        %v1744 = vadd.f32 %v1436, %v1743
        %v1745 = vpop.f32.mrb[0].mxu0
        %1746 = vmatprep.mubr.bf16.mxu0 0
        %1747 = vmatmul.mubr.bf16.gmra.mrb[0].mxu0 %v1514
        %v1748 = vpop.f32.mrb[0].mxu0
        %v1749 = vadd.f32 %v1436, %v1748
        %v1750 = vpop.f32.mrb[0].mxu0
        %v1751 = vpop.f32.mrb[0].mxu0
        %v1752 = vadd.f32 %v1436, %v1751
        %v1753 = vpop.f32.mrb[0].mxu0
        %1754 = vmatprep.mubr.bf16.mxu0 0
        %1755 = vmatmul.mubr.bf16.gmra.mrb[0].mxu0 %v1517
        %v1756 = vpop.f32.mrb[0].mxu0
        %v1757 = vadd.f32 %v1436, %v1756
        %v1758 = vpop.f32.mrb[0].mxu0
        %v1759 = vpop.f32.mrb[0].mxu0
        %v1760 = vadd.f32 %v1436, %v1759
        %v1761 = vpop.f32.mrb[0].mxu0
        %1762 = vmatprep.mubr.bf16.mxu0 0
        %1763 = vmatmul.mubr.bf16.gmra.mrb[0].mxu0 %v1520
        %v1764 = vpop.f32.mrb[0].mxu0
        %v1765 = vadd.f32 %v1436, %v1764
        %v1766 = vpop.f32.mrb[0].mxu0
        %v1767 = vpop.f32.mrb[0].mxu0
        %v1768 = vadd.f32 %v1436, %v1767
        %v1769 = vpop.f32.mrb[0].mxu0
        %1770 = vmatprep.mubr.bf16.mxu0 0
        %1771 = vmatmul.mubr.bf16.gmra.mrb[0].mxu0 %v1523
        %v1772 = vpop.f32.mrb[0].mxu0
        %v1773 = vadd.f32 %v1436, %v1772
        %v1774 = vpop.f32.mrb[0].mxu0
        %v1775 = vpop.f32.mrb[0].mxu0
        %v1776 = vadd.f32 %v1436, %v1775
        %v1777 = vpop.f32.mrb[0].mxu0
        %1778 = vmatprep.mubr.bf16.mxu0 0
        %1779 = vmatmul.mubr.bf16.gmra.mrb[0].mxu0 %v1526
        %v1780 = vpop.f32.mrb[0].mxu0
        %v1781 = vadd.f32 %v1436, %v1780
        %v1782 = vpop.f32.mrb[0].mxu0
        %v1783 = vpop.f32.mrb[0].mxu0
        %v1784 = vadd.f32 %v1436, %v1783
        %v1785 = vpop.f32.mrb[0].mxu0
        %1786 = vmatprep.mubr.bf16.mxu0 0
        %1787 = vmatmul.mubr.bf16.gmra.mrb[0].mxu0 %v1529
        %v1788 = vpop.f32.mrb[0].mxu0
        %v1789 = vadd.f32 %v1436, %v1788
        %v1790 = vpop.f32.mrb[0].mxu0
        %v1791 = vpop.f32.mrb[0].mxu0
        %v1792 = vadd.f32 %v1436, %v1791
        %v1793 = vpop.f32.mrb[0].mxu0
        %1794 = vmatprep.mubr.bf16.mxu0 0
        %1795 = vmatmul.mubr.bf16.gmra.mrb[0].mxu0 %v1532
        %v1796 = vpop.f32.mrb[0].mxu0
        %v1797 = vadd.f32 %v1436, %v1796
        %v1798 = vpop.f32.mrb[0].mxu0
        %v1799 = vpop.f32.mrb[0].mxu0
        %v1800 = vadd.f32 %v1436, %v1799
        %v1801 = vpop.f32.mrb[0].mxu0
        %1802 = vmatprep.mubr.bf16.mxu0 0
        %1803 = vmatmul.mubr.bf16.gmra.mrb[0].mxu0 %v1535
        %v1804 = vpop.f32.mrb[0].mxu0
        %v1805 = vadd.f32 %v1436, %v1804
        %v1806 = vpop.f32.mrb[0].mxu0
        %v1807 = vpop.f32.mrb[0].mxu0
        %v1808 = vadd.f32 %v1436, %v1807
        %v1809 = vpop.f32.mrb[0].mxu0
        %1810 = vmatprep.mubr.bf16.mxu0 0
        %1811 = vmatmul.mubr.bf16.gmra.mrb[0].mxu0 %v1538
        %v1812 = vpop.f32.mrb[0].mxu0
        %v1813 = vadd.f32 %v1436, %v1812
        %v1814 = vpop.f32.mrb[0].mxu0
        %v1815 = vpop.f32.mrb[0].mxu0
        %v1816 = vadd.f32 %v1436, %v1815
        %v1817 = vpop.f32.mrb[0].mxu0
        %1818 = vmatprep.mubr.bf16.mxu0 0
        %1819 = vmatmul.mubr.bf16.gmra.mrb[0].mxu0 %v1541
        %v1820 = vpop.f32.mrb[0].mxu0
        %v1821 = vadd.f32 %v1436, %v1820
        %v1822 = vpop.f32.mrb[0].mxu0
        %v1823 = vpop.f32.mrb[0].mxu0
        %v1824 = vadd.f32 %v1436, %v1823
        %v1825 = vpop.f32.mrb[0].mxu0
        %1826 = vmatprep.mubr.bf16.mxu0 0
        %1827 = vmatmul.mubr.bf16.gmra.mrb[0].mxu0 %v1544
        %v1828 = vpop.f32.mrb[0].mxu0
        %v1829 = vadd.f32 %v1436, %v1828
        %v1830 = vpop.f32.mrb[0].mxu0
        %v1831 = vpop.f32.mrb[0].mxu0
        %v1832 = vadd.f32 %v1436, %v1831
        %v1833 = vpop.f32.mrb[0].mxu0
        %1834 = vdwg.mxu0
        %v1835 = vpack.c.bf16 %v1584, %v1581
        %v1836 = vpack.c.bf16 %v1592, %v1589
        %v1837 = vpack.c.bf16 %v1600, %v1597
        %v1838 = vpack.c.bf16 %v1608, %v1605
        %v1839 = vpack.c.bf16 %v1616, %v1613
        %v1840 = vpack.c.bf16 %v1624, %v1621
        %v1841 = vpack.c.bf16 %v1632, %v1629
        %v1842 = vpack.c.bf16 %v1640, %v1637
        %v1843 = vpack.c.bf16 %v1648, %v1645
        %v1844 = vpack.c.bf16 %v1656, %v1653
        %v1845 = vpack.c.bf16 %v1664, %v1661
        %v1846 = vpack.c.bf16 %v1672, %v1669
        %v1847 = vpack.c.bf16 %v1680, %v1677
        %v1848 = vpack.c.bf16 %v1688, %v1685
        %v1849 = vpack.c.bf16 %v1696, %v1693
        %v1850 = vpack.c.bf16 %v1704, %v1701
        %v1851 = vpack.c.bf16 %v1712, %v1709
        %v1852 = vpack.c.bf16 %v1720, %v1717
        %v1853 = vpack.c.bf16 %v1728, %v1725
        %v1854 = vpack.c.bf16 %v1736, %v1733
        %v1855 = vpack.c.bf16 %v1744, %v1741
        %v1856 = vpack.c.bf16 %v1752, %v1749
        %v1857 = vpack.c.bf16 %v1760, %v1757
        %v1858 = vpack.c.bf16 %v1768, %v1765
        %v1859 = vpack.c.bf16 %v1776, %v1773
        %v1860 = vpack.c.bf16 %v1784, %v1781
        %v1861 = vpack.c.bf16 %v1792, %v1789
        %v1862 = vpack.c.bf16 %v1800, %v1797
        %v1863 = vpack.c.bf16 %v1808, %v1805
        %v1864 = vpack.c.bf16 %v1816, %v1813
        %v1865 = vpack.c.bf16 %v1824, %v1821
        %v1866 = vpack.c.bf16 %v1832, %v1829
        %v1899 = vunpack.c.l.b16 %v1835
        %v1900 = vunpack.c.h.b16 %v1835
        %v1901 = vunpack.c.l.b16 %v1836
        %v1902 = vunpack.c.h.b16 %v1836
        %v1903 = vunpack.c.l.b16 %v1837
        %v1904 = vunpack.c.h.b16 %v1837
        %v1905 = vunpack.c.l.b16 %v1838
        %v1906 = vunpack.c.h.b16 %v1838
        %v1907 = vunpack.c.l.b16 %v1839
        %v1908 = vunpack.c.h.b16 %v1839
        %v1909 = vunpack.c.l.b16 %v1840
        %v1910 = vunpack.c.h.b16 %v1840
        %v1911 = vunpack.c.l.b16 %v1841
        %v1912 = vunpack.c.h.b16 %v1841
        %v1913 = vunpack.c.l.b16 %v1842
        %v1914 = vunpack.c.h.b16 %v1842
        %v1915 = vunpack.c.l.b16 %v1843
        %v1916 = vunpack.c.h.b16 %v1843
        %v1917 = vunpack.c.l.b16 %v1844
        %v1918 = vunpack.c.h.b16 %v1844
        %v1919 = vunpack.c.l.b16 %v1845
        %v1920 = vunpack.c.h.b16 %v1845
        %v1921 = vunpack.c.l.b16 %v1846
        %v1922 = vunpack.c.h.b16 %v1846
        %v1923 = vunpack.c.l.b16 %v1847
        %v1924 = vunpack.c.h.b16 %v1847
        %v1925 = vunpack.c.l.b16 %v1848
        %v1926 = vunpack.c.h.b16 %v1848
        %v1927 = vunpack.c.l.b16 %v1849
        %v1928 = vunpack.c.h.b16 %v1849
        %v1929 = vunpack.c.l.b16 %v1850
        %v1930 = vunpack.c.h.b16 %v1850
        %v1931 = vunpack.c.l.b16 %v1851
        %v1932 = vunpack.c.h.b16 %v1851
        %v1933 = vunpack.c.l.b16 %v1852
        %v1934 = vunpack.c.h.b16 %v1852
        %v1935 = vunpack.c.l.b16 %v1853
        %v1936 = vunpack.c.h.b16 %v1853
        %v1937 = vunpack.c.l.b16 %v1854
        %v1938 = vunpack.c.h.b16 %v1854
        %v1939 = vunpack.c.l.b16 %v1855
        %v1940 = vunpack.c.h.b16 %v1855
        %v1941 = vunpack.c.l.b16 %v1856
        %v1942 = vunpack.c.h.b16 %v1856
        %v1943 = vunpack.c.l.b16 %v1857
        %v1944 = vunpack.c.h.b16 %v1857
        %v1945 = vunpack.c.l.b16 %v1858
        %v1946 = vunpack.c.h.b16 %v1858
        %v1947 = vunpack.c.l.b16 %v1859
        %v1948 = vunpack.c.h.b16 %v1859
        %v1949 = vunpack.c.l.b16 %v1860
        %v1950 = vunpack.c.h.b16 %v1860
        %v1951 = vunpack.c.l.b16 %v1861
        %v1952 = vunpack.c.h.b16 %v1861
        %v1953 = vunpack.c.l.b16 %v1862
        %v1954 = vunpack.c.h.b16 %v1862
        %v1955 = vunpack.c.l.b16 %v1863
        %v1956 = vunpack.c.h.b16 %v1863
        %v1957 = vunpack.c.l.b16 %v1864
        %v1958 = vunpack.c.h.b16 %v1864
        %v1959 = vunpack.c.l.b16 %v1865
        %v1960 = vunpack.c.h.b16 %v1865
        %v1961 = vunpack.c.l.b16 %v1866
        %v1962 = vunpack.c.h.b16 %v1866
        %v1963 = vpack.c.b16 %v1899, %v1899
        %v1964 = vpack.c.b16 %v1900, %v1900
        %v1965 = vpack.c.b16 %v1901, %v1901
        %v1966 = vpack.c.b16 %v1902, %v1902
        %v1967 = vpack.c.b16 %v1903, %v1903
        %v1968 = vpack.c.b16 %v1904, %v1904
        %v1969 = vpack.c.b16 %v1905, %v1905
        %v1970 = vpack.c.b16 %v1906, %v1906
        %v1971 = vpack.c.b16 %v1907, %v1907
        %v1972 = vpack.c.b16 %v1908, %v1908
        %v1973 = vpack.c.b16 %v1909, %v1909
        %v1974 = vpack.c.b16 %v1910, %v1910
        %v1975 = vpack.c.b16 %v1911, %v1911
        %v1976 = vpack.c.b16 %v1912, %v1912
        %v1977 = vpack.c.b16 %v1913, %v1913
        %v1978 = vpack.c.b16 %v1914, %v1914
        %v1979 = vpack.c.b16 %v1915, %v1915
        %v1980 = vpack.c.b16 %v1916, %v1916
        %v1981 = vpack.c.b16 %v1917, %v1917
        %v1982 = vpack.c.b16 %v1918, %v1918
        %v1983 = vpack.c.b16 %v1919, %v1919
        %v1984 = vpack.c.b16 %v1920, %v1920
        %v1985 = vpack.c.b16 %v1921, %v1921
        %v1986 = vpack.c.b16 %v1922, %v1922
        %v1987 = vpack.c.b16 %v1923, %v1923
        %v1988 = vpack.c.b16 %v1924, %v1924
        %v1989 = vpack.c.b16 %v1925, %v1925
        %v1990 = vpack.c.b16 %v1926, %v1926
        %v1991 = vpack.c.b16 %v1927, %v1927
        %v1992 = vpack.c.b16 %v1928, %v1928
        %v1993 = vpack.c.b16 %v1929, %v1929
        %v1994 = vpack.c.b16 %v1930, %v1930
        %v1995 = vpack.c.b16 %v1931, %v1931
        %v1996 = vpack.c.b16 %v1932, %v1932
        %v1997 = vpack.c.b16 %v1933, %v1933
        %v1998 = vpack.c.b16 %v1934, %v1934
        %v1999 = vpack.c.b16 %v1935, %v1935
        %v2000 = vpack.c.b16 %v1936, %v1936
        %v2001 = vpack.c.b16 %v1937, %v1937
        %v2002 = vpack.c.b16 %v1938, %v1938
        %v2003 = vpack.c.b16 %v1939, %v1939
        %v2004 = vpack.c.b16 %v1940, %v1940
        %v2005 = vpack.c.b16 %v1941, %v1941
        %v2006 = vpack.c.b16 %v1942, %v1942
        %v2007 = vpack.c.b16 %v1943, %v1943
        %v2008 = vpack.c.b16 %v1944, %v1944
        %v2009 = vpack.c.b16 %v1945, %v1945
        %v2010 = vpack.c.b16 %v1946, %v1946
        %v2011 = vpack.c.b16 %v1947, %v1947
        %v2012 = vpack.c.b16 %v1948, %v1948
        %v2013 = vpack.c.b16 %v1949, %v1949
        %v2014 = vpack.c.b16 %v1950, %v1950
        %v2015 = vpack.c.b16 %v1951, %v1951
        %v2016 = vpack.c.b16 %v1952, %v1952
        %v2017 = vpack.c.b16 %v1953, %v1953
        %v2018 = vpack.c.b16 %v1954, %v1954
        %v2019 = vpack.c.b16 %v1955, %v1955
        %v2020 = vpack.c.b16 %v1956, %v1956
        %v2021 = vpack.c.b16 %v1957, %v1957
        %v2022 = vpack.c.b16 %v1958, %v1958
        %v2023 = vpack.c.b16 %v1959, %v1959
        %v2024 = vpack.c.b16 %v1960, %v1960
        %v2025 = vpack.c.b16 %v1961, %v1961
        %v2026 = vpack.c.b16 %v1962, %v1962
        %2091 = vst [vmem:[%s284] sm:$0xf] %v1963
        %2092 = vst [vmem:[%s284 + $0x4] sm:$0xf] %v1964
        %2093 = vst [vmem:[%s284 + $0x8] sm:$0xf] %v1965
        %2094 = vst [vmem:[%s284 + $0xc] sm:$0xf] %v1966
        %2095 = vst [vmem:[%s284 + $0x10] sm:$0xf] %v1967
        %2096 = vst [vmem:[%s284 + $0x14] sm:$0xf] %v1968
        %2097 = vst [vmem:[%s284 + $0x18] sm:$0xf] %v1969
        %2098 = vst [vmem:[%s284 + $0x1c] sm:$0xf] %v1970
        %2099 = vst [vmem:[%s284 + $0x20] sm:$0xf] %v1971
        %2100 = vst [vmem:[%s284 + $0x24] sm:$0xf] %v1972
        %2101 = vst [vmem:[%s284 + $0x28] sm:$0xf] %v1973
        %2102 = vst [vmem:[%s284 + $0x2c] sm:$0xf] %v1974
        %2103 = vst [vmem:[%s284 + $0x30] sm:$0xf] %v1975
        %2104 = vst [vmem:[%s284 + $0x34] sm:$0xf] %v1976
        %2105 = vst [vmem:[%s284 + $0x38] sm:$0xf] %v1977
        %2106 = vst [vmem:[%s284 + $0x3c] sm:$0xf] %v1978
        %2107 = vst [vmem:[%s284 + $0x40] sm:$0xf] %v1979
        %2108 = vst [vmem:[%s284 + $0x44] sm:$0xf] %v1980
        %2109 = vst [vmem:[%s284 + $0x48] sm:$0xf] %v1981
        %2110 = vst [vmem:[%s284 + $0x4c] sm:$0xf] %v1982
        %2111 = vst [vmem:[%s284 + $0x50] sm:$0xf] %v1983
        %2112 = vst [vmem:[%s284 + $0x54] sm:$0xf] %v1984
        %2113 = vst [vmem:[%s284 + $0x58] sm:$0xf] %v1985
        %2114 = vst [vmem:[%s284 + $0x5c] sm:$0xf] %v1986
        %2115 = vst [vmem:[%s284 + $0x60] sm:$0xf] %v1987
        %2116 = vst [vmem:[%s284 + $0x64] sm:$0xf] %v1988
        %2117 = vst [vmem:[%s284 + $0x68] sm:$0xf] %v1989
        %2118 = vst [vmem:[%s284 + $0x6c] sm:$0xf] %v1990
        %2119 = vst [vmem:[%s284 + $0x70] sm:$0xf] %v1991
        %2120 = vst [vmem:[%s284 + $0x74] sm:$0xf] %v1992
        %2121 = vst [vmem:[%s284 + $0x78] sm:$0xf] %v1993
        %2122 = vst [vmem:[%s284 + $0x7c] sm:$0xf] %v1994
        %2123 = vst [vmem:[%s284 + $0x80] sm:$0xf] %v1995
        %2124 = vst [vmem:[%s284 + $0x84] sm:$0xf] %v1996
        %2125 = vst [vmem:[%s284 + $0x88] sm:$0xf] %v1997
        %2126 = vst [vmem:[%s284 + $0x8c] sm:$0xf] %v1998
        %2127 = vst [vmem:[%s284 + $0x90] sm:$0xf] %v1999
        %2128 = vst [vmem:[%s284 + $0x94] sm:$0xf] %v2000
        %2129 = vst [vmem:[%s284 + $0x98] sm:$0xf] %v2001
        %2130 = vst [vmem:[%s284 + $0x9c] sm:$0xf] %v2002
        %2131 = vst [vmem:[%s284 + $0xa0] sm:$0xf] %v2003
        %2132 = vst [vmem:[%s284 + $0xa4] sm:$0xf] %v2004
        %2133 = vst [vmem:[%s284 + $0xa8] sm:$0xf] %v2005
        %2134 = vst [vmem:[%s284 + $0xac] sm:$0xf] %v2006
        %2135 = vst [vmem:[%s284 + $0xb0] sm:$0xf] %v2007
        %2136 = vst [vmem:[%s284 + $0xb4] sm:$0xf] %v2008
        %2137 = vst [vmem:[%s284 + $0xb8] sm:$0xf] %v2009
        %2138 = vst [vmem:[%s284 + $0xbc] sm:$0xf] %v2010
        %2139 = vst [vmem:[%s284 + $0xc0] sm:$0xf] %v2011
        %2140 = vst [vmem:[%s284 + $0xc4] sm:$0xf] %v2012
        %2141 = vst [vmem:[%s284 + $0xc8] sm:$0xf] %v2013
        %2142 = vst [vmem:[%s284 + $0xcc] sm:$0xf] %v2014
        %2143 = vst [vmem:[%s284 + $0xd0] sm:$0xf] %v2015
        %2144 = vst [vmem:[%s284 + $0xd4] sm:$0xf] %v2016
        %2145 = vst [vmem:[%s284 + $0xd8] sm:$0xf] %v2017
        %2146 = vst [vmem:[%s284 + $0xdc] sm:$0xf] %v2018
        %2147 = vst [vmem:[%s284 + $0xe0] sm:$0xf] %v2019
        %2148 = vst [vmem:[%s284 + $0xe4] sm:$0xf] %v2020
        %2149 = vst [vmem:[%s284 + $0xe8] sm:$0xf] %v2021
        %2150 = vst [vmem:[%s284 + $0xec] sm:$0xf] %v2022
        %2151 = vst [vmem:[%s284 + $0xf0] sm:$0xf] %v2023
        %2152 = vst [vmem:[%s284 + $0xf4] sm:$0xf] %v2024
        %2153 = vst [vmem:[%s284 + $0xf8] sm:$0xf] %v2025
        %2154 = vst [vmem:[%s284 + $0xfc] sm:$0xf] %v2026
        %s2155 = sand.u32 %s181, 1
        %s2156 = scalar_lea.sflag [#allocation3], %s2155
        %s2157 = sand.u32 %s181, 1
        %s2158 = smul.addr %s2157, 256
        %s2159 = scalar_lea.vmem [#allocation2], %s2158
        // Predicated region
        $region49: #{tpu_custom_call.1} parent=47 // pred_check
          %p2160 = pneg %p191
        $region50: #{tpu_custom_call.1} parent=47 // pred_check_branch
          %2162 = sbr.rel (%p2160) target = $region52
        $region51: #{tpu_custom_call.1} parent=47 // pred_region
          %s2163 = smul.u32 64, %s21
          %s2164 = ssub.s32 125, %s2163
          %p2165 = scmp.lt.s32.totalorder %s2164, 64
          %s2166 = scalar_select %p2165, %s2164, 64
          %s2167 = smul.u32 64, %s2166
          %s2169 = ssub.s32 4096, %s2167
          %2170 = vsyncadd %s2156, %s2169
          %p2171 = scmp.ne.s32.totalorder 0, %s2167
          %s2172 = smul.addr %s2163, 64
          %s2173 = scalar_lea.hbm %s7, %s2172
          %s2174 = smul.u32 4, %s2166
          %s2175 = sshll.u32 %s2159, 4
          %s2176 = int_to_ptr.vmem [resolvable:$true] %s2175
          %s2177 = sshll.u32 %s2174, 4
          %2181 = dma.vmem_to_hbm [thread:$0]  (%p2171), %s2176, %s2177, %s2173, %s2156, 64, 64, 4
        $region52: #{tpu_custom_call.1} parent=47 // pred_fallthru
          _
      $region48: #{tpu_custom_call.1} parent=5 // pred_fallthru
        _
      %p2182 = scmp.le.s32.totalorder 2, %s16
      // Predicated region
      $region53: #{tpu_custom_call.1} parent=5 // pred_check
        %p2183 = pneg %p2182
      $region54: #{tpu_custom_call.1} parent=5 // pred_check_branch
        %2185 = sbr.rel (%p2183) target = $region56
      $region55: #{tpu_custom_call.1} parent=5 // pred_region
        %s2186 = ssub.s32 %s16, 2
        // Predicated region
        $region57: #{tpu_custom_call.1} parent=55 // pred_check
          %p2187 = pneg %p197
        $region58: #{tpu_custom_call.1} parent=55 // pred_check_branch
          %2189 = sbr.rel (%p2187) target = $region60
        $region59: #{tpu_custom_call.1} parent=55 // pred_region
          %s2190 = sand.u32 %s182, 1
          %s2191 = scalar_lea.sflag [#allocation3], %s2190
          %s2192 = sand.u32 %s182, 1
          %s2193 = smul.addr %s2192, 256
          %s2194 = scalar_lea.vmem [#allocation2], %s2193
          %2195 = dma.done %s2191, 4096
        $region60: #{tpu_custom_call.1} parent=55 // pred_fallthru
          _
      $region56: #{tpu_custom_call.1} parent=5 // pred_fallthru
        _
    $region6: #{tpu_custom_call.1} parent=1 // loop_footer
      %s20 = sadd.s32 1, %s16
    $region7: #{tpu_custom_call.1} parent=1 // loop_footer_branch
      %15 = sbr.rel target = $region3
    $region8: #{tpu_custom_call.1} parent=1 // loop_exit
      _
    %2196 = vsyncpa [#allocation3], 1
    %s2197 = scalar_lea.sflag [#allocation3], 1
    %2198 = vsyncpa %s2197, 1

</llo_original>
